<compile_context>
chip_gen: v7x
topology: tpu7x:2x2x1
jax: 0.10.0
libtpu: 0.0.40
codegen_flags: <defaults>
</compile_context>

<pallas_src>
import functools

import jax
import jax.numpy as jnp
from jax.experimental import pallas as pl
from jax.experimental.pallas import tpu as pltpu

FEATURE_DIM = 1536      # efficientnet_b3 num_features
STEM_CH = 40            # efficientnet_b3 stem channels
STEM_CH_PAD = 64        # pad 40 -> 64 (clean sublane multiple)
K_IM2COL = 27           # 3*3*3
K_PAD = 32              # pad 27 -> 32
BN_EPS = 1e-5
DEFAULT_BLOCK_S = 2048  # spatial rows per grid step


def _round_up(x, m):
    return (x + m - 1) // m * m


def _ceil_div(a, b):
    return -(-a // b)


def _pick_epilogue_dtype():
    # bf16 VPU/EUP exists on v6e/v7x; v5e (and older) keep the epilogue in f32.
    try:
        kind = jax.devices()[0].device_kind.lower()
    except Exception:
        kind = ""
    return jnp.bfloat16 if ("v6" in kind or "v7" in kind) else jnp.float32


def _silu(v):
    # silu(v) = v*sigmoid(v) = v * 0.5*(tanh(v/2)+1): one EUP transcendental, no VPU divide.
    return v * (0.5 * (jnp.tanh(0.5 * v) + 1.0))


# --------------------------------------------------------------------------- kernel
def fused_stem_head_pool_kernel(
    x_ref,    # (1, TS, K_PAD)         bf16      im2col patches for this (batch, split, tile)
    ws_ref,   # (K_PAD, STEM_CH_PAD)   bf16      stem conv weight (zero-padded)
    ss_ref,   # (1, STEM_CH_PAD)       f32       folded stem BN scale
    sb_ref,   # (1, STEM_CH_PAD)       f32       folded stem BN bias
    wh_ref,   # (STEM_CH_PAD, 1536)    bf16      head 1x1 conv weight (zero-padded rows)
    hs_ref,   # (1, 1536)              epi dtype folded head BN scale
    hb_ref,   # (1, 1536)              epi dtype folded head BN bias
    o_ref,    # (1, 1, 1, 1536)        f32       partial spatial sum for (batch, split)
    *, s_total, block_s, split_len, needs_mask, epilogue_dtype,
):
    sp = pl.program_id(1)
    sj = pl.program_id(2)

    # init accumulator (output block is resident across the spatial grid axis)
    @pl.when(sj == 0)
    def _():
        o_ref[...] = jnp.zeros_like(o_ref)

    x = x_ref[0]                                                      # (TS, K_PAD) bf16

    # --- stem: 3x3 stride-2 conv as matmul + folded BN2d + SiLU (f32, only 64 lanes) ---
    y = jnp.dot(x, ws_ref[...], preferred_element_type=jnp.float32)   # (TS, 64)
    y = y * ss_ref[...] + sb_ref[...]
    y = _silu(y)

    # --- head: 1x1 conv + folded BN2d + SiLU; epilogue bf16 on v6e/v7x, f32 on v5e ---
    z = jnp.dot(y.astype(jnp.bfloat16), wh_ref[...],
                preferred_element_type=epilogue_dtype)                # (TS, 1536)
    z = z * hs_ref[...] + hb_ref[...]
    z = _silu(z)

    # --- global-average-pool partial sum (f32 accumulation) ---
    def _accumulate(vals):
        o_ref[...] += jnp.sum(vals.astype(jnp.float32), axis=0)[None, None, None, :]

    if needs_mask:
        tile_end = sp * split_len + (sj + 1) * block_s

        @pl.when(tile_end > s_total)           # only tiles that touch padded rows pay the mask
        def _():
            row = (jax.lax.broadcasted_iota(jnp.int32, (block_s, 1), 0)
                   + sp * split_len + sj * block_s)
            _accumulate(jnp.where(row < s_total, z, 0.0))

        @pl.when(tile_end <= s_total)
        def _():
            _accumulate(z)
    else:
        _accumulate(z)


# --------------------------------------------------------------------------- wrapper
def fused_forward(patches, ws, ss, sb, wh, hs, hb, *, s_total, block_s,
                  split_len, n_split, needs_mask, epilogue_dtype):
    B = patches.shape[0]
    n_s = split_len // block_s
    kernel = functools.partial(
        fused_stem_head_pool_kernel, s_total=s_total, block_s=block_s,
        split_len=split_len, needs_mask=needs_mask, epilogue_dtype=epilogue_dtype)
    partial = pl.pallas_call(
        kernel,
        grid=(B, n_split, n_s),
        out_shape=jax.ShapeDtypeStruct((B, n_split, 1, FEATURE_DIM), jnp.float32),
        in_specs=[
            pl.BlockSpec((1, block_s, K_PAD), lambda b, sp, sj: (b, sp * n_s + sj, 0)),
            pl.BlockSpec((K_PAD, STEM_CH_PAD), lambda b, sp, sj: (0, 0)),
            pl.BlockSpec((1, STEM_CH_PAD), lambda b, sp, sj: (0, 0)),
            pl.BlockSpec((1, STEM_CH_PAD), lambda b, sp, sj: (0, 0)),
            pl.BlockSpec((STEM_CH_PAD, FEATURE_DIM), lambda b, sp, sj: (0, 0)),
            pl.BlockSpec((1, FEATURE_DIM), lambda b, sp, sj: (0, 0)),
            pl.BlockSpec((1, FEATURE_DIM), lambda b, sp, sj: (0, 0)),
        ],
        out_specs=pl.BlockSpec((1, 1, 1, FEATURE_DIM), lambda b, sp, sj: (b, sp, 0, 0)),
        compiler_params=pltpu.CompilerParams(
            dimension_semantics=("parallel", "parallel", "arbitrary"),
            vmem_limit_bytes=48 * 1024 * 1024,
        ),
    )(patches, ws, ss, sb, wh, hs, hb)
    return partial                                   # (B, n_split, 1, 1536) spatial sums


# --------------------------------------------------------------------------- glue
def fold_bn(gamma, beta, running_mean, running_var, eps=BN_EPS):
    scale = gamma / jnp.sqrt(running_var + eps)
    bias = beta - running_mean * scale
    return scale[None, :].astype(jnp.float32), bias[None, :].astype(jnp.float32)


def im2col_nhwc(x_nhwc, k=3, stride=2, pad=1):
    B, H, W, C = x_nhwc.shape
    xp = jnp.pad(x_nhwc, ((0, 0), (pad, pad), (pad, pad), (0, 0)))
    Ho = (H + 2 * pad - k) // stride + 1
    Wo = (W + 2 * pad - k) // stride + 1
    cols = [xp[:, dh:dh + stride * Ho:stride, dw:dw + stride * Wo:stride, :]
            for dh in range(k) for dw in range(k)]
    p = jnp.stack(cols, axis=-2)                        # (B, Ho, Wo, k*k, C)
    return p.reshape(B, Ho * Wo, k * k * C), Ho, Wo


def init_params(key):
    ks = jax.random.split(key, 10)
    p = {}
    # stem conv weight, PyTorch layout (Cout, Cin, kh, kw)
    p["stem_w"] = jax.random.normal(ks[0], (STEM_CH, 3, 3, 3), jnp.float32) * 0.1
    p["stem_gamma"] = jax.random.uniform(ks[1], (STEM_CH,), jnp.float32, 0.5, 1.5)
    p["stem_beta"] = jax.random.normal(ks[2], (STEM_CH,), jnp.float32) * 0.1
    p["stem_mean"] = jax.random.normal(ks[3], (STEM_CH,), jnp.float32) * 0.1
    p["stem_var"] = jax.random.uniform(ks[4], (STEM_CH,), jnp.float32, 0.5, 1.5)
    # head 1x1 conv (stand-in for efficientnet head conv) -> FEATURE_DIM
    p["head_w"] = jax.random.normal(ks[5], (STEM_CH, FEATURE_DIM), jnp.float32) * 0.05
    p["head_gamma"] = jax.random.uniform(ks[6], (FEATURE_DIM,), jnp.float32, 0.5, 1.5)
    p["head_beta"] = jax.random.normal(ks[7], (FEATURE_DIM,), jnp.float32) * 0.1
    p["head_mean"] = jax.random.normal(ks[8], (FEATURE_DIM,), jnp.float32) * 0.1
    p["head_var"] = jax.random.uniform(ks[9], (FEATURE_DIM,), jnp.float32, 0.5, 1.5)
    # BatchNorm1d(feature_dim) of CNNModel (fresh init: gamma=1, beta=0, mean=0, var=1)
    p["bn1d_gamma"] = jnp.ones((FEATURE_DIM,), jnp.float32)
    p["bn1d_beta"] = jnp.zeros((FEATURE_DIM,), jnp.float32)
    p["bn1d_mean"] = jnp.zeros((FEATURE_DIM,), jnp.float32)
    p["bn1d_var"] = jnp.ones((FEATURE_DIM,), jnp.float32)
    return p


def cnn_model_forward(x_nchw, params, *, block_s=DEFAULT_BLOCK_S, spatial_splits=None):
    B = x_nchw.shape[0]
    if spatial_splits is None:
        spatial_splits = 2 if B == 1 else 1      # keep both v7x TCs busy at tiny batch
    epilogue_dtype = _pick_epilogue_dtype()

    # NCHW -> NHWC; cast once to bf16 before im2col (fewer HBM passes).
    x_nhwc = jnp.transpose(x_nchw, (0, 2, 3, 1)).astype(jnp.bfloat16)
    patches, Ho, Wo = im2col_nhwc(x_nhwc)        # (B, S, 27) bf16
    S = Ho * Wo

    # spatial tiling: tile size multiple of 16 (bf16 sublane packing)
    ts = _round_up(max(16, min(block_s, S)), 16)
    n_split = max(1, spatial_splits)
    split_len = _round_up(max(_ceil_div(S, n_split), 1), ts)
    s_pad = split_len * n_split
    needs_mask = s_pad != S

    # single pad: spatial tail + K 27->32
    patches = jnp.pad(patches, ((0, 0), (0, s_pad - S), (0, K_PAD - K_IM2COL)))

    # stem conv weight: (Cout, Cin, kh, kw) -> (kh*kw*Cin, Cout), zero-pad to tiles
    ws = jnp.transpose(params["stem_w"], (2, 3, 1, 0)).reshape(K_IM2COL, STEM_CH)
    ws = jnp.pad(ws, ((0, K_PAD - K_IM2COL),
                      (0, STEM_CH_PAD - STEM_CH))).astype(jnp.bfloat16)
    ss, sb = fold_bn(params["stem_gamma"], params["stem_beta"],
                     params["stem_mean"], params["stem_var"])
    ss = jnp.pad(ss, ((0, 0), (0, STEM_CH_PAD - STEM_CH)))
    sb = jnp.pad(sb, ((0, 0), (0, STEM_CH_PAD - STEM_CH)))

    # head 1x1 conv weight, padded rows for the padded stem channels
    wh = jnp.pad(params["head_w"],
                 ((0, STEM_CH_PAD - STEM_CH), (0, 0))).astype(jnp.bfloat16)
    hs, hb = fold_bn(params["head_gamma"], params["head_beta"],
                     params["head_mean"], params["head_var"])
    hs = hs.astype(epilogue_dtype)
    hb = hb.astype(epilogue_dtype)

    # CNNModel head: BatchNorm1d (eval); dropout = identity in eval. Fold 1/S into scale.
    bs, bb = fold_bn(params["bn1d_gamma"], params["bn1d_beta"],
                     params["bn1d_mean"], params["bn1d_var"])
    bs = bs * (1.0 / S)

    partial = fused_forward(patches, ws, ss, sb, wh, hs, hb,
                            s_total=S, block_s=ts, split_len=split_len,
                            n_split=n_split, needs_mask=needs_mask,
                            epilogue_dtype=epilogue_dtype)
    pooled = jnp.sum(partial, axis=(1, 2))       # (B, 1536) spatial sum over all splits
    return pooled * bs + bb                      # mean (folded) + BatchNorm1d (eval)


def reference_forward(x_nchw, params):
    # pure-JAX f32 reference of the same fused math (stem conv+BN+SiLU -> head 1x1+BN+SiLU
    # -> global average pool -> BatchNorm1d eval)
    x = jnp.transpose(x_nchw, (0, 2, 3, 1)).astype(jnp.float32)
    patches, _, _ = im2col_nhwc(x)
    ws = jnp.transpose(params["stem_w"], (2, 3, 1, 0)).reshape(K_IM2COL, STEM_CH)
    ss, sb = fold_bn(params["stem_gamma"], params["stem_beta"],
                     params["stem_mean"], params["stem_var"])
    y = jax.nn.silu((patches @ ws) * ss + sb)
    hs, hb = fold_bn(params["head_gamma"], params["head_beta"],
                     params["head_mean"], params["head_var"])
    z = jax.nn.silu((y @ params["head_w"]) * hs + hb)
    pooled = jnp.mean(z, axis=1)
    bs, bb = fold_bn(params["bn1d_gamma"], params["bn1d_beta"],
                     params["bn1d_mean"], params["bn1d_var"])
    return pooled * bs + bb


if __name__ == "__main__":
    key = jax.random.PRNGKey(0)
    k_x, k_p = jax.random.split(key)
    x = jax.random.normal(k_x, (2, 3, 16, 16), jnp.float32)   # NCHW, like PyTorch
    params = init_params(k_p)

    ref = reference_forward(x, params)

    # run 1: small tile + 2 spatial splits (exercises accumulation + the v7x split path)
    fwd_a = jax.jit(functools.partial(cnn_model_forward, block_s=16, spatial_splits=2))
    out_a = jax.block_until_ready(fwd_a(x, params))

    # run 2: tile that does not divide S (exercises the masked last-tile path)
    fwd_b = jax.jit(functools.partial(cnn_model_forward, block_s=48, spatial_splits=1))
    out_b = jax.block_until_ready(fwd_b(x, params))

    for out in (out_a, out_b):
        assert out.shape == (2, FEATURE_DIM) and out.dtype == jnp.float32
        assert bool(jnp.all(jnp.isfinite(out)))
        assert float(jnp.max(jnp.abs(out - ref))) < 5e-2      # bf16 matmul tolerance

    print("KERNEL_OK")
</pallas_src>

<mosaic_0001>
module attributes {stable_mosaic.version = 11 : i64} {
  func.func @fused_stem_head_pool_kernel(%arg0: i32, %arg1: i32, %arg2: i32, %arg3: memref<1x16x32xbf16, #tpu.memory_space<vmem>>, %arg4: memref<32x64xbf16, #tpu.memory_space<vmem>>, %arg5: memref<1x64xf32, #tpu.memory_space<vmem>>, %arg6: memref<1x64xf32, #tpu.memory_space<vmem>>, %arg7: memref<64x1536xbf16, #tpu.memory_space<vmem>>, %arg8: memref<1x1536xf32, #tpu.memory_space<vmem>>, %arg9: memref<1x1536xf32, #tpu.memory_space<vmem>>, %arg10: memref<1x1x1x1536xf32, #tpu.memory_space<vmem>>) attributes {dimension_semantics = [#tpu.dimension_semantics<parallel>, #tpu.dimension_semantics<parallel>, #tpu.dimension_semantics<arbitrary>], iteration_bounds = array<i64: 2, 2, 2>, scalar_prefetch = 0 : i64, scratch_operands = 0 : i64, tpu.core_type = #tpu.core_type<tc>, window_params = [{transform_indices = @transform_0, window_bounds = array<i64: 1, 16, 32>}, {pipeline_mode = #tpu.pipeline_mode<synchronous>, transform_indices = @transform_1, window_bounds = array<i64: 32, 64>}, {pipeline_mode = #tpu.pipeline_mode<synchronous>, transform_indices = @transform_2, window_bounds = array<i64: 1, 64>}, {pipeline_mode = #tpu.pipeline_mode<synchronous>, transform_indices = @transform_3, window_bounds = array<i64: 1, 64>}, {pipeline_mode = #tpu.pipeline_mode<synchronous>, transform_indices = @transform_4, window_bounds = array<i64: 64, 1536>}, {pipeline_mode = #tpu.pipeline_mode<synchronous>, transform_indices = @transform_5, window_bounds = array<i64: 1, 1536>}, {pipeline_mode = #tpu.pipeline_mode<synchronous>, transform_indices = @transform_6, window_bounds = array<i64: 1, 1536>}, {transform_indices = @transform_7, window_bounds = array<i64: 1, 1, 1, 1536>}]} {
    %c0_i32 = arith.constant 0 : i32
    %0 = arith.cmpi eq, %arg2, %c0_i32 : i32
    %1 = arith.extui %0 : i1 to i32
    %c0_i32_0 = arith.constant 0 : i32
    %2 = arith.cmpi ne, %1, %c0_i32_0 : i32
    scf.if %2 {
      %cst_31 = arith.constant 0.000000e+00 : f32
      %43 = vector.broadcast %cst_31 : f32 to vector<1x1x1x1536xf32>
      %c0_32 = arith.constant 0 : index
      %c0_33 = arith.constant 0 : index
      %c0_34 = arith.constant 0 : index
      %c0_35 = arith.constant 0 : index
      %44 = vector.load %arg10[%c0_32, %c0_33, %c0_34, %c0_35] : memref<1x1x1x1536xf32, #tpu.memory_space<vmem>>, vector<1x1x1x1536xf32>
      tpu.vector_store %arg10[%c0_32, %c0_33, %c0_34, %c0_35], %43 {strides = array<i32>} : memref<1x1x1x1536xf32, #tpu.memory_space<vmem>>, vector<1x1x1x1536xf32>,
    } else {
    }
    %c0 = arith.constant 0 : index
    %c0_1 = arith.constant 0 : index
    %c0_2 = arith.constant 0 : index
    %3 = vector.load %arg3[%c0, %c0_1, %c0_2] : memref<1x16x32xbf16, #tpu.memory_space<vmem>>, vector<1x16x32xbf16>
    %4 = vector.shape_cast %3 : vector<1x16x32xbf16> to vector<16x32xbf16>
    %c0_3 = arith.constant 0 : index
    %c0_4 = arith.constant 0 : index
    %5 = vector.load %arg4[%c0_3, %c0_4] : memref<32x64xbf16, #tpu.memory_space<vmem>>, vector<32x64xbf16>
    %cst = arith.constant dense<0.000000e+00> : vector<16x64xf32>
    %6 = tpu.matmul %4, %5, %cst {dimension_numbers = #tpu.dot_dimension_numbers<[1], [0], [0], [1], [0, 0, 1, 1], [], []>} : vector<16x32xbf16>, vector<32x64xbf16>, vector<16x64xf32> -> vector<16x64xf32>
    %c0_5 = arith.constant 0 : index
    %c0_6 = arith.constant 0 : index
    %7 = vector.load %arg5[%c0_5, %c0_6] : memref<1x64xf32, #tpu.memory_space<vmem>>, vector<1x64xf32>
    %8 = vector.broadcast %7 : vector<1x64xf32> to vector<16x64xf32>
    %9 = arith.mulf %6, %8 : vector<16x64xf32>
    %c0_7 = arith.constant 0 : index
    %c0_8 = arith.constant 0 : index
    %10 = vector.load %arg6[%c0_7, %c0_8] : memref<1x64xf32, #tpu.memory_space<vmem>>, vector<1x64xf32>
    %11 = vector.broadcast %10 : vector<1x64xf32> to vector<16x64xf32>
    %12 = arith.addf %9, %11 : vector<16x64xf32>
    %cst_9 = arith.constant 5.000000e-01 : f32
    %13 = vector.broadcast %cst_9 : f32 to vector<16x64xf32>
    %14 = arith.mulf %13, %12 : vector<16x64xf32>
    %15 = math.tanh %14 : vector<16x64xf32>
    %cst_10 = arith.constant 1.000000e+00 : f32
    %16 = vector.broadcast %cst_10 : f32 to vector<16x64xf32>
    %17 = arith.addf %15, %16 : vector<16x64xf32>
    %cst_11 = arith.constant 5.000000e-01 : f32
    %18 = vector.broadcast %cst_11 : f32 to vector<16x64xf32>
    %19 = arith.mulf %18, %17 : vector<16x64xf32>
    %20 = arith.mulf %12, %19 : vector<16x64xf32>
    %21 = arith.truncf %20 : vector<16x64xf32> to vector<16x64xbf16>
    %c0_12 = arith.constant 0 : index
    %c0_13 = arith.constant 0 : index
    %22 = vector.load %arg7[%c0_12, %c0_13] : memref<64x1536xbf16, #tpu.memory_space<vmem>>, vector<64x1536xbf16>
    %cst_14 = arith.constant dense<0.000000e+00> : vector<16x1536xf32>
    %23 = tpu.matmul %21, %22, %cst_14 {dimension_numbers = #tpu.dot_dimension_numbers<[1], [0], [0], [1], [0, 0, 1, 1], [], []>} : vector<16x64xbf16>, vector<64x1536xbf16>, vector<16x1536xf32> -> vector<16x1536xf32>
    %c0_15 = arith.constant 0 : index
    %c0_16 = arith.constant 0 : index
    %24 = vector.load %arg8[%c0_15, %c0_16] : memref<1x1536xf32, #tpu.memory_space<vmem>>, vector<1x1536xf32>
    %25 = vector.broadcast %24 : vector<1x1536xf32> to vector<16x1536xf32>
    %26 = arith.mulf %23, %25 : vector<16x1536xf32>
    %c0_17 = arith.constant 0 : index
    %c0_18 = arith.constant 0 : index
    %27 = vector.load %arg9[%c0_17, %c0_18] : memref<1x1536xf32, #tpu.memory_space<vmem>>, vector<1x1536xf32>
    %28 = vector.broadcast %27 : vector<1x1536xf32> to vector<16x1536xf32>
    %29 = arith.addf %26, %28 : vector<16x1536xf32>
    %cst_19 = arith.constant 5.000000e-01 : f32
    %30 = vector.broadcast %cst_19 : f32 to vector<16x1536xf32>
    %31 = arith.mulf %30, %29 : vector<16x1536xf32>
    %32 = math.tanh %31 : vector<16x1536xf32>
    %cst_20 = arith.constant 1.000000e+00 : f32
    %33 = vector.broadcast %cst_20 : f32 to vector<16x1536xf32>
    %34 = arith.addf %32, %33 : vector<16x1536xf32>
    %cst_21 = arith.constant 5.000000e-01 : f32
    %35 = vector.broadcast %cst_21 : f32 to vector<16x1536xf32>
    %36 = arith.mulf %35, %34 : vector<16x1536xf32>
    %37 = arith.mulf %29, %36 : vector<16x1536xf32>
    %c0_22 = arith.constant 0 : index
    %c0_23 = arith.constant 0 : index
    %c0_24 = arith.constant 0 : index
    %c0_25 = arith.constant 0 : index
    %38 = vector.load %arg10[%c0_22, %c0_23, %c0_24, %c0_25] : memref<1x1x1x1536xf32, #tpu.memory_space<vmem>>, vector<1x1x1x1536xf32>
    %cst_26 = arith.constant dense<0.000000e+00> : vector<1536xf32>
    %39 = vector.multi_reduction <add>, %37, %cst_26 [0] : vector<16x1536xf32> to vector<1536xf32>
    %40 = vector.shape_cast %39 : vector<1536xf32> to vector<1x1x1x1536xf32>
    %41 = arith.addf %38, %40 : vector<1x1x1x1536xf32>
    %c0_27 = arith.constant 0 : index
    %c0_28 = arith.constant 0 : index
    %c0_29 = arith.constant 0 : index
    %c0_30 = arith.constant 0 : index
    %42 = vector.load %arg10[%c0_27, %c0_28, %c0_29, %c0_30] : memref<1x1x1x1536xf32, #tpu.memory_space<vmem>>, vector<1x1x1x1536xf32>
    tpu.vector_store %arg10[%c0_27, %c0_28, %c0_29, %c0_30], %41 {strides = array<i32>} : memref<1x1x1x1536xf32, #tpu.memory_space<vmem>>, vector<1x1x1x1536xf32>,
    return
  }
  func.func @transform_0(%arg0: i32, %arg1: i32, %arg2: i32) -> (i32, i32, i32) {
    %c2_i32 = arith.constant 2 : i32
    %0 = arith.muli %arg1, %c2_i32 : i32
    %1 = arith.addi %0, %arg2 : i32
    %c0_i32 = arith.constant 0 : i32
    %c0_i32_0 = arith.constant 0 : i32
    return %arg0, %1, %c0_i32 : i32, i32, i32
  }
  func.func @transform_1(%arg0: i32, %arg1: i32, %arg2: i32) -> (i32, i32) {
    %c0_i32 = arith.constant 0 : i32
    %c0_i32_0 = arith.constant 0 : i32
    %c0_i32_1 = arith.constant 0 : i32
    return %c0_i32, %c0_i32_0 : i32, i32
  }
  func.func @transform_2(%arg0: i32, %arg1: i32, %arg2: i32) -> (i32, i32) {
    %c0_i32 = arith.constant 0 : i32
    %c0_i32_0 = arith.constant 0 : i32
    %c0_i32_1 = arith.constant 0 : i32
    return %c0_i32, %c0_i32_0 : i32, i32
  }
  func.func @transform_3(%arg0: i32, %arg1: i32, %arg2: i32) -> (i32, i32) {
    %c0_i32 = arith.constant 0 : i32
    %c0_i32_0 = arith.constant 0 : i32
    %c0_i32_1 = arith.constant 0 : i32
    return %c0_i32, %c0_i32_0 : i32, i32
  }
  func.func @transform_4(%arg0: i32, %arg1: i32, %arg2: i32) -> (i32, i32) {
    %c0_i32 = arith.constant 0 : i32
    %c0_i32_0 = arith.constant 0 : i32
    %c0_i32_1 = arith.constant 0 : i32
    return %c0_i32, %c0_i32_0 : i32, i32
  }
  func.func @transform_5(%arg0: i32, %arg1: i32, %arg2: i32) -> (i32, i32) {
    %c0_i32 = arith.constant 0 : i32
    %c0_i32_0 = arith.constant 0 : i32
    %c0_i32_1 = arith.constant 0 : i32
    return %c0_i32, %c0_i32_0 : i32, i32
  }
  func.func @transform_6(%arg0: i32, %arg1: i32, %arg2: i32) -> (i32, i32) {
    %c0_i32 = arith.constant 0 : i32
    %c0_i32_0 = arith.constant 0 : i32
    %c0_i32_1 = arith.constant 0 : i32
    return %c0_i32, %c0_i32_0 : i32, i32
  }
  func.func @transform_7(%arg0: i32, %arg1: i32, %arg2: i32) -> (i32, i32, i32, i32) {
    %c0_i32 = arith.constant 0 : i32
    %c0_i32_0 = arith.constant 0 : i32
    %c0_i32_1 = arith.constant 0 : i32
    return %arg0, %arg1, %c0_i32, %c0_i32_0 : i32, i32, i32, i32
  }
}

</mosaic_0001>

<llo_original>
// kernel: cnn_model_forward.1
$region0: #{cnn_model_forward.1}
  #allocation0 [shape = 'u32[]', space=smem, size = 0x4, offset = 0x4, fixed_abs, tag = 'smem constant byte address 0x4 - core index']
  #allocation1 [shape = 'u32[144,128]{1,0:T(1,128)}', space=vmem, size = 0x12000, scoped, tag = 'internal scratch']
  %s0 = inlined_call_operand.vmem [shape: bf16[2,64,32], index: 0, kind: input, shape index: {}]
  %s1 = inlined_call_operand.vmem [shape: bf16[32,64], index: 1, kind: input, shape index: {}]
  %s2 = inlined_call_operand.vmem [shape: f32[1,64], index: 2, kind: input, shape index: {}]
  %s3 = inlined_call_operand.vmem [shape: f32[1,64], index: 3, kind: input, shape index: {}]
  %s4 = inlined_call_operand.vmem [shape: bf16[64,1536], index: 4, kind: input, shape index: {}]
  %s5 = inlined_call_operand.vmem [shape: f32[1,1536], index: 5, kind: input, shape index: {}]
  %s6 = inlined_call_operand.vmem [shape: f32[1,1536], index: 6, kind: input, shape index: {}]
  %s7 = inlined_call_operand.vmem [shape: f32[2,2,1,1536], index: 7, kind: output, shape index: {}]
  %s8 = sld [smem:[#allocation0]]
  $region65: #{cnn_model_forward.1} parent=0
    _
  %s10 = ssub.s32 1, %s8
  %s11 = scalar_select 0, %s10, %s8
  loop: start=0, step=1, limit=10
  $region2: #{cnn_model_forward.1} parent=0 // loop_pre_header
    _
  $region3: #{cnn_model_forward.1} parent=0 // loop_header
    %s13 = sphi 0, %s17
    %p14 = scmp.ge.s32.totalorder %s13, 10
    %s20 = sphi 0, %s39
    %s21 = sphi 0, %s35
    %s22 = sphi 0, %s31
    %s23 = sphi 0, %s20
    %s24 = sphi 0, %s21
    %s25 = sphi 0, %s22
    %s26 = sphi 0, %s23
    %s27 = sphi 0, %s24
    %s28 = sphi 0, %s25
    %s48 = sphi 0, %s50
    %s51 = sphi 0, %s48
    %s52 = sphi 0, %s51
    %s68 = sphi 0, %s52
    %s72 = sphi 0, %s72
    %s74 = sphi 0, %s72
    %s75 = sphi 0, %s74
    %s89 = sphi 0, %s75
    %s93 = sphi 0, %s93
    %s95 = sphi 0, %s93
    %s96 = sphi 0, %s95
    %s110 = sphi 0, %s96
    %s114 = sphi 0, %s114
    %s116 = sphi 0, %s114
    %s117 = sphi 0, %s116
    %s131 = sphi 0, %s117
    %s135 = sphi 0, %s135
    %s137 = sphi 0, %s135
    %s138 = sphi 0, %s137
    %s152 = sphi 0, %s138
    %s156 = sphi 0, %s156
    %s158 = sphi 0, %s156
    %s159 = sphi 0, %s158
    %s173 = sphi 0, %s159
    %s177 = sphi 0, %s177
    %s179 = sphi 0, %s177
    %s180 = sphi 0, %s179
    %s194 = sphi 0, %s180
    %s202 = sphi 0, %s204
    %s205 = sphi 0, %s202
    %s206 = sphi 0, %s205
    %s222 = sphi 0, %s206
  $region4: #{cnn_model_forward.1} parent=0 // loop_header_branch
    %16 = sbr.rel (%p14) target = $region8
  $region5: #{cnn_model_forward.1} parent=0 // loop_body
    %s18 = ssub.s32 %s13, 1
    %s19 = ssub.s32 %s13, 2
    %s29 = sadd.s32 1, %s22
    %p30 = scmp.ge.s32.totalorder %s29, 2
    %s31 = scalar_select %p30, 0, %s29
    %s32 = sadd.s32 1, %s21
    %s33 = scalar_select %p30, %s32, %s21
    %p34 = scmp.ge.s32.totalorder %s33, 2
    %s35 = scalar_select %p34, 0, %s33
    %s36 = sadd.s32 1, %s20
    %s37 = scalar_select %p34, %s36, %s20
    %p38 = scmp.ge.s32.totalorder %s37, 2
    %s39 = scalar_select %p38, 0, %s37
    %s40 = smul.u32 %s21, 2
    %s41 = sadd.s32 %s40, %s22
    %s42 = smul.u32 %s35, 2
    %s43 = sadd.s32 %s42, %s31
    %s44 = ssub.s32 %s20, %s39
    %s45 = ssub.s32 %s41, %s43
    %s46 = sor.u32 %s44, %s45
    %p47 = scmp.eq.s32.totalorder %s46, 0
    %s49 = sadd.s32 %s48, 1
    %s50 = scalar_select %p47, %s48, %s49
    %p53 = pneg %p47
    %p54 = scmp.eq.s32.totalorder %s13, 7
    %p55 = por %p53, %p54
    %p56 = scmp.ne.s32.totalorder %s48, %s51
    %p57 = scmp.eq.s32.totalorder %s13, 0
    %p58 = por %p56, %p57
    %p59 = scmp.ne.s32.totalorder %s48, %s51
    %p60 = scmp.eq.s32.totalorder %s18, 7
    %p61 = por %p59, %p60
    %p62 = scmp.ne.s32.totalorder %s51, %s52
    %p63 = scmp.eq.s32.totalorder %s18, 0
    %p64 = por %p62, %p63
    %p65 = scmp.ne.s32.totalorder %s51, %s52
    %p66 = scmp.eq.s32.totalorder %s19, 7
    %p67 = por %p65, %p66
    %p69 = scmp.ne.s32.totalorder %s52, %s68
    %p70 = scmp.eq.s32.totalorder %s19, 0
    %p71 = por %p69, %p70
    %s73 = sadd.s32 %s72, 1
    %p76 = scmp.eq.s32.totalorder %s13, 7
    %p77 = scmp.ne.s32.totalorder %s72, %s74
    %p78 = scmp.eq.s32.totalorder %s13, 0
    %p79 = por %p77, %p78
    %p80 = scmp.ne.s32.totalorder %s72, %s74
    %p81 = scmp.eq.s32.totalorder %s18, 7
    %p82 = por %p80, %p81
    %p83 = scmp.ne.s32.totalorder %s74, %s75
    %p84 = scmp.eq.s32.totalorder %s18, 0
    %p85 = por %p83, %p84
    %p86 = scmp.ne.s32.totalorder %s74, %s75
    %p87 = scmp.eq.s32.totalorder %s19, 7
    %p88 = por %p86, %p87
    %p90 = scmp.ne.s32.totalorder %s75, %s89
    %p91 = scmp.eq.s32.totalorder %s19, 0
    %p92 = por %p90, %p91
    %s94 = sadd.s32 %s93, 1
    %p97 = scmp.eq.s32.totalorder %s13, 7
    %p98 = scmp.ne.s32.totalorder %s93, %s95
    %p99 = scmp.eq.s32.totalorder %s13, 0
    %p100 = por %p98, %p99
    %p101 = scmp.ne.s32.totalorder %s93, %s95
    %p102 = scmp.eq.s32.totalorder %s18, 7
    %p103 = por %p101, %p102
    %p104 = scmp.ne.s32.totalorder %s95, %s96
    %p105 = scmp.eq.s32.totalorder %s18, 0
    %p106 = por %p104, %p105
    %p107 = scmp.ne.s32.totalorder %s95, %s96
    %p108 = scmp.eq.s32.totalorder %s19, 7
    %p109 = por %p107, %p108
    %p111 = scmp.ne.s32.totalorder %s96, %s110
    %p112 = scmp.eq.s32.totalorder %s19, 0
    %p113 = por %p111, %p112
    %s115 = sadd.s32 %s114, 1
    %p118 = scmp.eq.s32.totalorder %s13, 7
    %p119 = scmp.ne.s32.totalorder %s114, %s116
    %p120 = scmp.eq.s32.totalorder %s13, 0
    %p121 = por %p119, %p120
    %p122 = scmp.ne.s32.totalorder %s114, %s116
    %p123 = scmp.eq.s32.totalorder %s18, 7
    %p124 = por %p122, %p123
    %p125 = scmp.ne.s32.totalorder %s116, %s117
    %p126 = scmp.eq.s32.totalorder %s18, 0
    %p127 = por %p125, %p126
    %p128 = scmp.ne.s32.totalorder %s116, %s117
    %p129 = scmp.eq.s32.totalorder %s19, 7
    %p130 = por %p128, %p129
    %p132 = scmp.ne.s32.totalorder %s117, %s131
    %p133 = scmp.eq.s32.totalorder %s19, 0
    %p134 = por %p132, %p133
    %s136 = sadd.s32 %s135, 1
    %p139 = scmp.eq.s32.totalorder %s13, 7
    %p140 = scmp.ne.s32.totalorder %s135, %s137
    %p141 = scmp.eq.s32.totalorder %s13, 0
    %p142 = por %p140, %p141
    %p143 = scmp.ne.s32.totalorder %s135, %s137
    %p144 = scmp.eq.s32.totalorder %s18, 7
    %p145 = por %p143, %p144
    %p146 = scmp.ne.s32.totalorder %s137, %s138
    %p147 = scmp.eq.s32.totalorder %s18, 0
    %p148 = por %p146, %p147
    %p149 = scmp.ne.s32.totalorder %s137, %s138
    %p150 = scmp.eq.s32.totalorder %s19, 7
    %p151 = por %p149, %p150
    %p153 = scmp.ne.s32.totalorder %s138, %s152
    %p154 = scmp.eq.s32.totalorder %s19, 0
    %p155 = por %p153, %p154
    %s157 = sadd.s32 %s156, 1
    %p160 = scmp.eq.s32.totalorder %s13, 7
    %p161 = scmp.ne.s32.totalorder %s156, %s158
    %p162 = scmp.eq.s32.totalorder %s13, 0
    %p163 = por %p161, %p162
    %p164 = scmp.ne.s32.totalorder %s156, %s158
    %p165 = scmp.eq.s32.totalorder %s18, 7
    %p166 = por %p164, %p165
    %p167 = scmp.ne.s32.totalorder %s158, %s159
    %p168 = scmp.eq.s32.totalorder %s18, 0
    %p169 = por %p167, %p168
    %p170 = scmp.ne.s32.totalorder %s158, %s159
    %p171 = scmp.eq.s32.totalorder %s19, 7
    %p172 = por %p170, %p171
    %p174 = scmp.ne.s32.totalorder %s159, %s173
    %p175 = scmp.eq.s32.totalorder %s19, 0
    %p176 = por %p174, %p175
    %s178 = sadd.s32 %s177, 1
    %p181 = scmp.eq.s32.totalorder %s13, 7
    %p182 = scmp.ne.s32.totalorder %s177, %s179
    %p183 = scmp.eq.s32.totalorder %s13, 0
    %p184 = por %p182, %p183
    %p185 = scmp.ne.s32.totalorder %s177, %s179
    %p186 = scmp.eq.s32.totalorder %s18, 7
    %p187 = por %p185, %p186
    %p188 = scmp.ne.s32.totalorder %s179, %s180
    %p189 = scmp.eq.s32.totalorder %s18, 0
    %p190 = por %p188, %p189
    %p191 = scmp.ne.s32.totalorder %s179, %s180
    %p192 = scmp.eq.s32.totalorder %s19, 7
    %p193 = por %p191, %p192
    %p195 = scmp.ne.s32.totalorder %s180, %s194
    %p196 = scmp.eq.s32.totalorder %s19, 0
    %p197 = por %p195, %p196
    %s198 = ssub.s32 %s20, %s39
    %s199 = ssub.s32 %s21, %s35
    %s200 = sor.u32 %s198, %s199
    %p201 = scmp.eq.s32.totalorder %s200, 0
    %s203 = sadd.s32 %s202, 1
    %s204 = scalar_select %p201, %s202, %s203
    %p207 = pneg %p201
    %p208 = scmp.eq.s32.totalorder %s13, 7
    %p209 = por %p207, %p208
    %p210 = scmp.ne.s32.totalorder %s202, %s205
    %p211 = scmp.eq.s32.totalorder %s13, 0
    %p212 = por %p210, %p211
    %p213 = scmp.ne.s32.totalorder %s202, %s205
    %p214 = scmp.eq.s32.totalorder %s18, 7
    %p215 = por %p213, %p214
    %p216 = scmp.ne.s32.totalorder %s205, %s206
    %p217 = scmp.eq.s32.totalorder %s18, 0
    %p218 = por %p216, %p217
    %p219 = scmp.ne.s32.totalorder %s205, %s206
    %p220 = scmp.eq.s32.totalorder %s19, 7
    %p221 = por %p219, %p220
    %p223 = scmp.ne.s32.totalorder %s206, %s222
    %p224 = scmp.eq.s32.totalorder %s19, 0
    %p225 = por %p223, %p224
    %p226 = scmp.le.s32.totalorder 1, %s13
    %p227 = scmp.lt.s32.totalorder %s13, 9
    %p228 = pnand %p226, %p227
    %p229 = pneg %p228
    // Predicated region
    $region9: #{cnn_model_forward.1} parent=5 // pred_check
      _
    $region10: #{cnn_model_forward.1} parent=5 // pred_check_branch
      %231 = sbr.rel (%p228) target = $region12
    $region11: #{cnn_model_forward.1} parent=5 // pred_region
      %s232 = ssub.s32 %s13, 1
      // Predicated region
      $region13: #{cnn_model_forward.1} parent=11 // pred_check
        %p233 = pneg %p85
      $region14: #{cnn_model_forward.1} parent=11 // pred_check_branch
        %235 = sbr.rel (%p233) target = $region16
      $region15: #{cnn_model_forward.1} parent=11 // pred_region
        _
      $region16: #{cnn_model_forward.1} parent=11 // pred_fallthru
        _
      // Predicated region
      $region17: #{cnn_model_forward.1} parent=11 // pred_check
        %p236 = pneg %p106
      $region18: #{cnn_model_forward.1} parent=11 // pred_check_branch
        %238 = sbr.rel (%p236) target = $region20
      $region19: #{cnn_model_forward.1} parent=11 // pred_region
        _
      $region20: #{cnn_model_forward.1} parent=11 // pred_fallthru
        _
      // Predicated region
      $region21: #{cnn_model_forward.1} parent=11 // pred_check
        %p239 = pneg %p127
      $region22: #{cnn_model_forward.1} parent=11 // pred_check_branch
        %241 = sbr.rel (%p239) target = $region24
      $region23: #{cnn_model_forward.1} parent=11 // pred_region
        _
      $region24: #{cnn_model_forward.1} parent=11 // pred_fallthru
        _
      // Predicated region
      $region25: #{cnn_model_forward.1} parent=11 // pred_check
        %p242 = pneg %p148
      $region26: #{cnn_model_forward.1} parent=11 // pred_check_branch
        %244 = sbr.rel (%p242) target = $region28
      $region27: #{cnn_model_forward.1} parent=11 // pred_region
        _
      $region28: #{cnn_model_forward.1} parent=11 // pred_fallthru
        _
      // Predicated region
      $region29: #{cnn_model_forward.1} parent=11 // pred_check
        %p245 = pneg %p169
      $region30: #{cnn_model_forward.1} parent=11 // pred_check_branch
        %247 = sbr.rel (%p245) target = $region32
      $region31: #{cnn_model_forward.1} parent=11 // pred_region
        _
      $region32: #{cnn_model_forward.1} parent=11 // pred_fallthru
        _
      // Predicated region
      $region33: #{cnn_model_forward.1} parent=11 // pred_check
        %p248 = pneg %p190
      $region34: #{cnn_model_forward.1} parent=11 // pred_check_branch
        %250 = sbr.rel (%p248) target = $region36
      $region35: #{cnn_model_forward.1} parent=11 // pred_region
        _
      $region36: #{cnn_model_forward.1} parent=11 // pred_fallthru
        _
    $region12: #{cnn_model_forward.1} parent=5 // pred_fallthru
      _
    %p251 = scmp.lt.s32.totalorder %s13, 8
    // Predicated region
    $region37: #{cnn_model_forward.1} parent=5 // pred_check
      %p252 = pneg %p251
    $region38: #{cnn_model_forward.1} parent=5 // pred_check_branch
      %254 = sbr.rel (%p252) target = $region40
    $region39: #{cnn_model_forward.1} parent=5 // pred_region
      // Predicated region
      $region41: #{cnn_model_forward.1} parent=39 // pred_check
        %p255 = pneg %p58
      $region42: #{cnn_model_forward.1} parent=39 // pred_check_branch
        %257 = sbr.rel (%p255) target = $region44
      $region43: #{cnn_model_forward.1} parent=39 // pred_region
        %s258 = smul.u32 %s21, 2
        %s259 = sadd.s32 %s258, %s22
        %s260 = smul.u32 2, %s259
        %p261 = scmp.lt.s32.totalorder %s20, 1
        %s262 = scalar_select %p261, %s20, 1
        %p263 = scmp.lt.s32.totalorder %s260, 7
        %s264 = scalar_select %p263, %s260, 7
        %s265 = smul.addr %s262, 8
        %s266 = sadd.s32 %s264, %s265
        %s267 = smul.addr %s266, 4
        %s268 = scalar_lea.vmem %s0, %s267
        %s269 = smul.u32 %s21, 2
        %s270 = sadd.s32 %s269, %s22
        %s271 = smul.u32 2, %s270
      $region44: #{cnn_model_forward.1} parent=39 // pred_fallthru
        _
    $region40: #{cnn_model_forward.1} parent=5 // pred_fallthru
      _
    %p272 = scmp.le.s32.totalorder 1, %s13
    %p273 = scmp.lt.s32.totalorder %s13, 9
    %p274 = pnand %p272, %p273
    %p275 = pneg %p274
    // Predicated region
    $region45: #{cnn_model_forward.1} parent=5 // pred_check
      _
    $region46: #{cnn_model_forward.1} parent=5 // pred_check_branch
      %277 = sbr.rel (%p274) target = $region48
    $region47: #{cnn_model_forward.1} parent=5 // pred_region
      %s278 = ssub.s32 %s13, 1
      %s279 = smul.u32 %s24, 2
      %s280 = sadd.s32 %s279, %s25
      %s281 = smul.u32 2, %s280
      %p282 = scmp.lt.s32.totalorder %s23, 1
      %s283 = scalar_select %p282, %s23, 1
      %p284 = scmp.lt.s32.totalorder %s281, 7
      %s285 = scalar_select %p284, %s281, 7
      %s286 = smul.addr %s283, 8
      %s287 = sadd.s32 %s285, %s286
      %s288 = smul.addr %s287, 4
      %s289 = scalar_lea.vmem %s0, %s288
      %p290 = pneg %p64
      %p291 = pneg %p61
      %p292 = pneg %p85
      %p293 = pneg %p82
      %p294 = pneg %p106
      %p295 = pneg %p103
      %p296 = pneg %p127
      %p297 = pneg %p124
      %p298 = pneg %p148
      %p299 = pneg %p145
      %p300 = pneg %p169
      %p301 = pneg %p166
      %p302 = pneg %p190
      %p303 = pneg %p187
      %p304 = pneg %p218
      %p305 = pneg %p215
      %p306 = scmp.lt.s32.totalorder %s23, 1
      %s307 = scalar_select %p306, %s23, 1
      %p308 = scmp.lt.s32.totalorder %s24, 1
      %s309 = scalar_select %p308, %s24, 1
      %s310 = smul.addr %s309, 12
      %s311 = smul.addr %s307, 24
      %s312 = sadd.s32 %s310, %s311
      %s313 = scalar_lea.vmem %s7, %s312
      %s314 = smul.u32 %s24, 2
      %s315 = sadd.s32 %s314, %s25
      %s316 = smul.u32 2, %s315
      %p317 = scmp.lt.s32.totalorder %s23, 1
      %s318 = scalar_select %p317, %s23, 1
      %p319 = scmp.lt.s32.totalorder %s316, 7
      %s320 = scalar_select %p319, %s316, 7
      %s321 = smul.addr %s318, 8
      %s322 = sadd.s32 %s320, %s321
      %s323 = smul.addr %s322, 4
      %s324 = scalar_lea.vmem %s0, %s323
      %s325 = smul.u32 %s24, 2
      %s326 = sadd.s32 %s325, %s25
      %s327 = smul.u32 2, %s326
      %p328 = scmp.lt.s32.totalorder %s23, 1
      %s329 = scalar_select %p328, %s23, 1
      %p330 = scmp.lt.s32.totalorder %s24, 1
      %s331 = scalar_select %p330, %s24, 1
      %s332 = smul.addr %s331, 12
      %s333 = smul.addr %s329, 24
      %s334 = sadd.s32 %s332, %s333
      %s335 = scalar_lea.vmem %s7, %s334
      %p337 = scmp.eq.s32.totalorder %s25, 0
      // Predicated region
      $region49: #{cnn_model_forward.1} parent=47 // pred_check
        %p338 = pneg %p337
      $region50: #{cnn_model_forward.1} parent=47 // pred_check_branch
        %340 = sbr.rel (%p338) target = $region52
      $region51: #{cnn_model_forward.1} parent=47 // pred_region
        %341 = vst [vmem:[%s335] sm:$0xff] 0.0
        %v342 = vlaneseq
        %vm343 = vcmp.ge.s32.totalorder %v342, 0
        %vm344 = vcmp.lt.s32.totalorder %v342, 512
        %vm345 = vmand %vm343, %vm344
        %346 = vst.msk [vmem:[%s335 + $0x8] sm:$0xf] %vm345, 0.0
      $region52: #{cnn_model_forward.1} parent=47 // pred_fallthru
        _
      %v347 = vld [vmem:[%s324] sm:$0xf]
      %v348 = vld [vmem:[%s324 + $0x4] sm:$0xf]
      %v349 = vld [vmem:[%s1] sm:$0xf]
      %v350 = vld [vmem:[%s1 + $0x4] sm:$0xf]
      %v351 = vld [vmem:[%s1 + $0x8] sm:$0xf]
      %v352 = vld [vmem:[%s1 + $0xc] sm:$0xf]
      %v355 = vunpack.c.l.b16 %v347
      %v356 = vunpack.c.l.b16 %v348
      %v357 = vpack.c.b16 %v356, %v355
      %v362 = vunpack.c.l.b16 %v349
      %v363 = vunpack.c.l.b16 %v350
      %v364 = vunpack.c.l.b16 %v351
      %v365 = vunpack.c.l.b16 %v352
      %v366 = vpack.c.b16 %v363, %v362
      %v367 = vpack.c.b16 %v365, %v364
      %vm370 = vcmask 261120
      %v372 = vsel %vm370, %v357, 0
      %374 = vmatprep.subr.bf16.mxu0 0
      %375 = vmatpush1.bf16.msra.mxu0 %v366
      %376 = vmatprep.subr.bf16.mxu0 0
      %377 = vmatpush1.bf16.msra.mxu0 %v367
      %378 = vmatprep.subr.bf16.mxu0 0
      %379 = vmatpush1.bf16.msra.mxu0 0
      %380 = vmatprep.subr.bf16.mxu0 0
      %381 = vmatpush1.bf16.msra.mxu0 0
      %382 = vmatprep.subr.bf16.mxu0 0
      %383 = vmatpush1.bf16.msra.mxu0 0
      %384 = vmatprep.subr.bf16.mxu0 0
      %385 = vmatpush1.bf16.msra.mxu0 0
      %386 = vmatprep.subr.bf16.mxu0 0
      %387 = vmatpush1.bf16.msra.mxu0 0
      %388 = vmatprep.subr.bf16.mxu0 0
      %389 = vmatpush1.bf16.msra.mxu0 0
      %390 = vmatprep.subr.bf16.mxu0 0
      %391 = vmatpush1.bf16.msra.mxu0 0
      %392 = vmatprep.subr.bf16.mxu0 0
      %393 = vmatpush1.bf16.msra.mxu0 0
      %394 = vmatprep.subr.bf16.mxu0 0
      %395 = vmatpush1.bf16.msra.mxu0 0
      %396 = vmatprep.subr.bf16.mxu0 0
      %397 = vmatpush1.bf16.msra.mxu0 0
      %398 = vmatprep.subr.bf16.mxu0 0
      %399 = vmatpush1.bf16.msra.mxu0 0
      %400 = vmatprep.subr.bf16.mxu0 0
      %401 = vmatpush1.bf16.msra.mxu0 0
      %402 = vmatprep.subr.bf16.mxu0 0
      %403 = vmatpush1.bf16.msra.mxu0 0
      %404 = vmatprep.subr.bf16.mxu0 0
      %405 = vmatpush1.bf16.msra.mxu0 0
      %406 = vmatprep.mubr.bf16.mxu0 0
      %407 = vmatmul.mubr.bf16.gmra.mrb[0].mxu0 %v372
      %v408 = vpop.f32.mrb[0].mxu0
      %v409 = vadd.f32 0.0, %v408
      %v410 = vpop.f32.mrb[0].mxu0
      %v411 = vpop.f32.mrb[0].mxu0
      %v412 = vadd.f32 0.0, %v411
      %v413 = vpop.f32.mrb[0].mxu0
      %414 = vdwg.mxu0
      %v415 = vld [vmem:[%s2] sm:$0x1]
      %v417 = vlaneseq
      %v418 = vshrl.u32 %v417, 7
      %v419 = vsub.s32 0, %v418
      %v420 = vrot.slane %v415, %v419
      %v422 = vmul.f32 %v409, %v420
      %v423 = vmul.f32 %v412, %v420
      %v424 = vld [vmem:[%s3] sm:$0x1]
      %v426 = vlaneseq
      %v427 = vshrl.u32 %v426, 7
      %v428 = vsub.s32 0, %v427
      %v429 = vrot.slane %v424, %v428
      %v431 = vadd.f32 %v422, %v429
      %v432 = vadd.f32 %v423, %v429
      %v433 = vmul.f32 %v431, 0.5
      %v434 = vmul.f32 %v432, 0.5
      %v435 = vtanh.pop %v433
      %v436 = vtanh.pop %v434
      %v437 = vadd.f32 %v435, 1.0
      %v438 = vadd.f32 %v436, 1.0
      %v439 = vmul.f32 %v437, 0.5
      %v440 = vmul.f32 %v438, 0.5
      %v441 = vmul.f32 %v431, %v439
      %v442 = vmul.f32 %v432, %v440
      %v443 = vpack.c.bf16 %v442, %v441
      %v444 = vld [vmem:[%s4] sm:$0xff]
      %v445 = vld [vmem:[%s4 + $0x8] sm:$0xff]
      %v446 = vld [vmem:[%s4 + $0x10] sm:$0xff]
      %v447 = vld [vmem:[%s4 + $0x18] sm:$0xff]
      %v448 = vld [vmem:[%s4 + $0x20] sm:$0xff]
      %v449 = vld [vmem:[%s4 + $0x28] sm:$0xff]
      %v450 = vld [vmem:[%s4 + $0x30] sm:$0xff]
      %v451 = vld [vmem:[%s4 + $0x38] sm:$0xff]
      %v452 = vld [vmem:[%s4 + $0x40] sm:$0xff]
      %v453 = vld [vmem:[%s4 + $0x48] sm:$0xff]
      %v454 = vld [vmem:[%s4 + $0x50] sm:$0xff]
      %v455 = vld [vmem:[%s4 + $0x58] sm:$0xff]
      %v456 = vld [vmem:[%s4 + $0x60] sm:$0xff]
      %v457 = vld [vmem:[%s4 + $0x68] sm:$0xff]
      %v458 = vld [vmem:[%s4 + $0x70] sm:$0xff]
      %v459 = vld [vmem:[%s4 + $0x78] sm:$0xff]
      %v460 = vld [vmem:[%s4 + $0x80] sm:$0xff]
      %v461 = vld [vmem:[%s4 + $0x88] sm:$0xff]
      %v462 = vld [vmem:[%s4 + $0x90] sm:$0xff]
      %v463 = vld [vmem:[%s4 + $0x98] sm:$0xff]
      %v464 = vld [vmem:[%s4 + $0xa0] sm:$0xff]
      %v465 = vld [vmem:[%s4 + $0xa8] sm:$0xff]
      %v466 = vld [vmem:[%s4 + $0xb0] sm:$0xff]
      %v467 = vld [vmem:[%s4 + $0xb8] sm:$0xff]
      %v468 = vld [vmem:[%s4 + $0xc0] sm:$0xff]
      %v469 = vld [vmem:[%s4 + $0xc8] sm:$0xff]
      %v470 = vld [vmem:[%s4 + $0xd0] sm:$0xff]
      %v471 = vld [vmem:[%s4 + $0xd8] sm:$0xff]
      %v472 = vld [vmem:[%s4 + $0xe0] sm:$0xff]
      %v473 = vld [vmem:[%s4 + $0xe8] sm:$0xff]
      %v474 = vld [vmem:[%s4 + $0xf0] sm:$0xff]
      %v475 = vld [vmem:[%s4 + $0xf8] sm:$0xff]
      %v476 = vld [vmem:[%s4 + $0x100] sm:$0xff]
      %v477 = vld [vmem:[%s4 + $0x108] sm:$0xff]
      %v478 = vld [vmem:[%s4 + $0x110] sm:$0xff]
      %v479 = vld [vmem:[%s4 + $0x118] sm:$0xff]
      %v480 = vld [vmem:[%s4 + $0x120] sm:$0xff]
      %v481 = vld [vmem:[%s4 + $0x128] sm:$0xff]
      %v482 = vld [vmem:[%s4 + $0x130] sm:$0xff]
      %v483 = vld [vmem:[%s4 + $0x138] sm:$0xff]
      %v484 = vld [vmem:[%s4 + $0x140] sm:$0xff]
      %v485 = vld [vmem:[%s4 + $0x148] sm:$0xff]
      %v486 = vld [vmem:[%s4 + $0x150] sm:$0xff]
      %v487 = vld [vmem:[%s4 + $0x158] sm:$0xff]
      %v488 = vld [vmem:[%s4 + $0x160] sm:$0xff]
      %v489 = vld [vmem:[%s4 + $0x168] sm:$0xff]
      %v490 = vld [vmem:[%s4 + $0x170] sm:$0xff]
      %v491 = vld [vmem:[%s4 + $0x178] sm:$0xff]
      %v540 = vunpack.c.l.b16 %v444
      %v541 = vunpack.c.h.b16 %v444
      %v542 = vunpack.c.l.b16 %v445
      %v543 = vunpack.c.h.b16 %v445
      %v544 = vunpack.c.l.b16 %v446
      %v545 = vunpack.c.h.b16 %v446
      %v546 = vunpack.c.l.b16 %v447
      %v547 = vunpack.c.h.b16 %v447
      %v548 = vunpack.c.l.b16 %v448
      %v549 = vunpack.c.h.b16 %v448
      %v550 = vunpack.c.l.b16 %v449
      %v551 = vunpack.c.h.b16 %v449
      %v552 = vunpack.c.l.b16 %v450
      %v553 = vunpack.c.h.b16 %v450
      %v554 = vunpack.c.l.b16 %v451
      %v555 = vunpack.c.h.b16 %v451
      %v556 = vunpack.c.l.b16 %v452
      %v557 = vunpack.c.h.b16 %v452
      %v558 = vunpack.c.l.b16 %v453
      %v559 = vunpack.c.h.b16 %v453
      %v560 = vunpack.c.l.b16 %v454
      %v561 = vunpack.c.h.b16 %v454
      %v562 = vunpack.c.l.b16 %v455
      %v563 = vunpack.c.h.b16 %v455
      %v564 = vunpack.c.l.b16 %v456
      %v565 = vunpack.c.h.b16 %v456
      %v566 = vunpack.c.l.b16 %v457
      %v567 = vunpack.c.h.b16 %v457
      %v568 = vunpack.c.l.b16 %v458
      %v569 = vunpack.c.h.b16 %v458
      %v570 = vunpack.c.l.b16 %v459
      %v571 = vunpack.c.h.b16 %v459
      %v572 = vunpack.c.l.b16 %v460
      %v573 = vunpack.c.h.b16 %v460
      %v574 = vunpack.c.l.b16 %v461
      %v575 = vunpack.c.h.b16 %v461
      %v576 = vunpack.c.l.b16 %v462
      %v577 = vunpack.c.h.b16 %v462
      %v578 = vunpack.c.l.b16 %v463
      %v579 = vunpack.c.h.b16 %v463
      %v580 = vunpack.c.l.b16 %v464
      %v581 = vunpack.c.h.b16 %v464
      %v582 = vunpack.c.l.b16 %v465
      %v583 = vunpack.c.h.b16 %v465
      %v584 = vunpack.c.l.b16 %v466
      %v585 = vunpack.c.h.b16 %v466
      %v586 = vunpack.c.l.b16 %v467
      %v587 = vunpack.c.h.b16 %v467
      %v588 = vunpack.c.l.b16 %v468
      %v589 = vunpack.c.h.b16 %v468
      %v590 = vunpack.c.l.b16 %v469
      %v591 = vunpack.c.h.b16 %v469
      %v592 = vunpack.c.l.b16 %v470
      %v593 = vunpack.c.h.b16 %v470
      %v594 = vunpack.c.l.b16 %v471
      %v595 = vunpack.c.h.b16 %v471
      %v596 = vunpack.c.l.b16 %v472
      %v597 = vunpack.c.h.b16 %v472
      %v598 = vunpack.c.l.b16 %v473
      %v599 = vunpack.c.h.b16 %v473
      %v600 = vunpack.c.l.b16 %v474
      %v601 = vunpack.c.h.b16 %v474
      %v602 = vunpack.c.l.b16 %v475
      %v603 = vunpack.c.h.b16 %v475
      %v604 = vunpack.c.l.b16 %v476
      %v605 = vunpack.c.h.b16 %v476
      %v606 = vunpack.c.l.b16 %v477
      %v607 = vunpack.c.h.b16 %v477
      %v608 = vunpack.c.l.b16 %v478
      %v609 = vunpack.c.h.b16 %v478
      %v610 = vunpack.c.l.b16 %v479
      %v611 = vunpack.c.h.b16 %v479
      %v612 = vunpack.c.l.b16 %v480
      %v613 = vunpack.c.h.b16 %v480
      %v614 = vunpack.c.l.b16 %v481
      %v615 = vunpack.c.h.b16 %v481
      %v616 = vunpack.c.l.b16 %v482
      %v617 = vunpack.c.h.b16 %v482
      %v618 = vunpack.c.l.b16 %v483
      %v619 = vunpack.c.h.b16 %v483
      %v620 = vunpack.c.l.b16 %v484
      %v621 = vunpack.c.h.b16 %v484
      %v622 = vunpack.c.l.b16 %v485
      %v623 = vunpack.c.h.b16 %v485
      %v624 = vunpack.c.l.b16 %v486
      %v625 = vunpack.c.h.b16 %v486
      %v626 = vunpack.c.l.b16 %v487
      %v627 = vunpack.c.h.b16 %v487
      %v628 = vunpack.c.l.b16 %v488
      %v629 = vunpack.c.h.b16 %v488
      %v630 = vunpack.c.l.b16 %v489
      %v631 = vunpack.c.h.b16 %v489
      %v632 = vunpack.c.l.b16 %v490
      %v633 = vunpack.c.h.b16 %v490
      %v634 = vunpack.c.l.b16 %v491
      %v635 = vunpack.c.h.b16 %v491
      %v636 = vpack.c.b16 %v552, %v540
      %v637 = vpack.c.b16 %v553, %v541
      %v638 = vpack.c.b16 %v554, %v542
      %v639 = vpack.c.b16 %v555, %v543
      %v640 = vpack.c.b16 %v556, %v544
      %v641 = vpack.c.b16 %v557, %v545
      %v642 = vpack.c.b16 %v558, %v546
      %v643 = vpack.c.b16 %v559, %v547
      %v644 = vpack.c.b16 %v560, %v548
      %v645 = vpack.c.b16 %v561, %v549
      %v646 = vpack.c.b16 %v562, %v550
      %v647 = vpack.c.b16 %v563, %v551
      %v648 = vpack.c.b16 %v576, %v564
      %v649 = vpack.c.b16 %v577, %v565
      %v650 = vpack.c.b16 %v578, %v566
      %v651 = vpack.c.b16 %v579, %v567
      %v652 = vpack.c.b16 %v580, %v568
      %v653 = vpack.c.b16 %v581, %v569
      %v654 = vpack.c.b16 %v582, %v570
      %v655 = vpack.c.b16 %v583, %v571
      %v656 = vpack.c.b16 %v584, %v572
      %v657 = vpack.c.b16 %v585, %v573
      %v658 = vpack.c.b16 %v586, %v574
      %v659 = vpack.c.b16 %v587, %v575
      %v660 = vpack.c.b16 %v600, %v588
      %v661 = vpack.c.b16 %v601, %v589
      %v662 = vpack.c.b16 %v602, %v590
      %v663 = vpack.c.b16 %v603, %v591
      %v664 = vpack.c.b16 %v604, %v592
      %v665 = vpack.c.b16 %v605, %v593
      %v666 = vpack.c.b16 %v606, %v594
      %v667 = vpack.c.b16 %v607, %v595
      %v668 = vpack.c.b16 %v608, %v596
      %v669 = vpack.c.b16 %v609, %v597
      %v670 = vpack.c.b16 %v610, %v598
      %v671 = vpack.c.b16 %v611, %v599
      %v672 = vpack.c.b16 %v624, %v612
      %v673 = vpack.c.b16 %v625, %v613
      %v674 = vpack.c.b16 %v626, %v614
      %v675 = vpack.c.b16 %v627, %v615
      %v676 = vpack.c.b16 %v628, %v616
      %v677 = vpack.c.b16 %v629, %v617
      %v678 = vpack.c.b16 %v630, %v618
      %v679 = vpack.c.b16 %v631, %v619
      %v680 = vpack.c.b16 %v632, %v620
      %v681 = vpack.c.b16 %v633, %v621
      %v682 = vpack.c.b16 %v634, %v622
      %v683 = vpack.c.b16 %v635, %v623
      %vm732 = vcmask 523264
      %v734 = vsel %vm732, %v443, 0
      %736 = vmatprep.subr.bf16.mxu0 %v637
      %737 = vmatpush1.bf16.msra.mxu0 %v636
      %738 = vmatprep.subr.bf16.mxu0 %v649
      %739 = vmatpush1.bf16.msra.mxu0 %v648
      %740 = vmatprep.subr.bf16.mxu0 %v661
      %741 = vmatpush1.bf16.msra.mxu0 %v660
      %742 = vmatprep.subr.bf16.mxu0 %v673
      %743 = vmatpush1.bf16.msra.mxu0 %v672
      %744 = vmatprep.subr.bf16.mxu0 0
      %745 = vmatpush1.bf16.msra.mxu0 0
      %746 = vmatprep.subr.bf16.mxu0 0
      %747 = vmatpush1.bf16.msra.mxu0 0
      %748 = vmatprep.subr.bf16.mxu0 0
      %749 = vmatpush1.bf16.msra.mxu0 0
      %750 = vmatprep.subr.bf16.mxu0 0
      %751 = vmatpush1.bf16.msra.mxu0 0
      %752 = vmatprep.subr.bf16.mxu0 0
      %753 = vmatpush1.bf16.msra.mxu0 0
      %754 = vmatprep.subr.bf16.mxu0 0
      %755 = vmatpush1.bf16.msra.mxu0 0
      %756 = vmatprep.subr.bf16.mxu0 0
      %757 = vmatpush1.bf16.msra.mxu0 0
      %758 = vmatprep.subr.bf16.mxu0 0
      %759 = vmatpush1.bf16.msra.mxu0 0
      %760 = vmatprep.subr.bf16.mxu0 0
      %761 = vmatpush1.bf16.msra.mxu0 0
      %762 = vmatprep.subr.bf16.mxu0 0
      %763 = vmatpush1.bf16.msra.mxu0 0
      %764 = vmatprep.subr.bf16.mxu0 0
      %765 = vmatpush1.bf16.msra.mxu0 0
      %766 = vmatprep.subr.bf16.mxu0 0
      %767 = vmatpush1.bf16.msra.mxu0 0
      %768 = vmatprep.mubr.bf16.mxu0 0
      %769 = vmatmul.mubr.bf16.gmra.mrb[0].mxu0 %v734
      %v770 = vpop.f32.mrb[0].mxu0
      %v771 = vadd.f32 0.0, %v770
      %v772 = vpop.f32.mrb[0].mxu0
      %v773 = vadd.f32 0.0, %v772
      %v774 = vpop.f32.mrb[0].mxu0
      %v775 = vadd.f32 0.0, %v774
      %v776 = vpop.f32.mrb[0].mxu0
      %v777 = vadd.f32 0.0, %v776
      %778 = vdwg.mxu0
      %779 = vmatprep.subr.bf16.mxu0 %v639
      %780 = vmatpush1.bf16.msra.mxu0 %v638
      %781 = vmatprep.subr.bf16.mxu0 %v651
      %782 = vmatpush1.bf16.msra.mxu0 %v650
      %783 = vmatprep.subr.bf16.mxu0 %v663
      %784 = vmatpush1.bf16.msra.mxu0 %v662
      %785 = vmatprep.subr.bf16.mxu0 %v675
      %786 = vmatpush1.bf16.msra.mxu0 %v674
      %787 = vmatprep.subr.bf16.mxu0 0
      %788 = vmatpush1.bf16.msra.mxu0 0
      %789 = vmatprep.subr.bf16.mxu0 0
      %790 = vmatpush1.bf16.msra.mxu0 0
      %791 = vmatprep.subr.bf16.mxu0 0
      %792 = vmatpush1.bf16.msra.mxu0 0
      %793 = vmatprep.subr.bf16.mxu0 0
      %794 = vmatpush1.bf16.msra.mxu0 0
      %795 = vmatprep.subr.bf16.mxu0 0
      %796 = vmatpush1.bf16.msra.mxu0 0
      %797 = vmatprep.subr.bf16.mxu0 0
      %798 = vmatpush1.bf16.msra.mxu0 0
      %799 = vmatprep.subr.bf16.mxu0 0
      %800 = vmatpush1.bf16.msra.mxu0 0
      %801 = vmatprep.subr.bf16.mxu0 0
      %802 = vmatpush1.bf16.msra.mxu0 0
      %803 = vmatprep.subr.bf16.mxu0 0
      %804 = vmatpush1.bf16.msra.mxu0 0
      %805 = vmatprep.subr.bf16.mxu0 0
      %806 = vmatpush1.bf16.msra.mxu0 0
      %807 = vmatprep.subr.bf16.mxu0 0
      %808 = vmatpush1.bf16.msra.mxu0 0
      %809 = vmatprep.subr.bf16.mxu0 0
      %810 = vmatpush1.bf16.msra.mxu0 0
      %811 = vmatprep.mubr.bf16.mxu0 0
      %812 = vmatmul.mubr.bf16.gmra.mrb[0].mxu0 %v734
      %v813 = vpop.f32.mrb[0].mxu0
      %v814 = vadd.f32 0.0, %v813
      %v815 = vpop.f32.mrb[0].mxu0
      %v816 = vadd.f32 0.0, %v815
      %v817 = vpop.f32.mrb[0].mxu0
      %v818 = vadd.f32 0.0, %v817
      %v819 = vpop.f32.mrb[0].mxu0
      %v820 = vadd.f32 0.0, %v819
      %821 = vdwg.mxu0
      %822 = vmatprep.subr.bf16.mxu0 %v641
      %823 = vmatpush1.bf16.msra.mxu0 %v640
      %824 = vmatprep.subr.bf16.mxu0 %v653
      %825 = vmatpush1.bf16.msra.mxu0 %v652
      %826 = vmatprep.subr.bf16.mxu0 %v665
      %827 = vmatpush1.bf16.msra.mxu0 %v664
      %828 = vmatprep.subr.bf16.mxu0 %v677
      %829 = vmatpush1.bf16.msra.mxu0 %v676
      %830 = vmatprep.subr.bf16.mxu0 0
      %831 = vmatpush1.bf16.msra.mxu0 0
      %832 = vmatprep.subr.bf16.mxu0 0
      %833 = vmatpush1.bf16.msra.mxu0 0
      %834 = vmatprep.subr.bf16.mxu0 0
      %835 = vmatpush1.bf16.msra.mxu0 0
      %836 = vmatprep.subr.bf16.mxu0 0
      %837 = vmatpush1.bf16.msra.mxu0 0
      %838 = vmatprep.subr.bf16.mxu0 0
      %839 = vmatpush1.bf16.msra.mxu0 0
      %840 = vmatprep.subr.bf16.mxu0 0
      %841 = vmatpush1.bf16.msra.mxu0 0
      %842 = vmatprep.subr.bf16.mxu0 0
      %843 = vmatpush1.bf16.msra.mxu0 0
      %844 = vmatprep.subr.bf16.mxu0 0
      %845 = vmatpush1.bf16.msra.mxu0 0
      %846 = vmatprep.subr.bf16.mxu0 0
      %847 = vmatpush1.bf16.msra.mxu0 0
      %848 = vmatprep.subr.bf16.mxu0 0
      %849 = vmatpush1.bf16.msra.mxu0 0
      %850 = vmatprep.subr.bf16.mxu0 0
      %851 = vmatpush1.bf16.msra.mxu0 0
      %852 = vmatprep.subr.bf16.mxu0 0
      %853 = vmatpush1.bf16.msra.mxu0 0
      %854 = vmatprep.mubr.bf16.mxu0 0
      %855 = vmatmul.mubr.bf16.gmra.mrb[0].mxu0 %v734
      %v856 = vpop.f32.mrb[0].mxu0
      %v857 = vadd.f32 0.0, %v856
      %v858 = vpop.f32.mrb[0].mxu0
      %v859 = vadd.f32 0.0, %v858
      %v860 = vpop.f32.mrb[0].mxu0
      %v861 = vadd.f32 0.0, %v860
      %v862 = vpop.f32.mrb[0].mxu0
      %v863 = vadd.f32 0.0, %v862
      %864 = vdwg.mxu0
      %865 = vmatprep.subr.bf16.mxu0 %v643
      %866 = vmatpush1.bf16.msra.mxu0 %v642
      %867 = vmatprep.subr.bf16.mxu0 %v655
      %868 = vmatpush1.bf16.msra.mxu0 %v654
      %869 = vmatprep.subr.bf16.mxu0 %v667
      %870 = vmatpush1.bf16.msra.mxu0 %v666
      %871 = vmatprep.subr.bf16.mxu0 %v679
      %872 = vmatpush1.bf16.msra.mxu0 %v678
      %873 = vmatprep.subr.bf16.mxu0 0
      %874 = vmatpush1.bf16.msra.mxu0 0
      %875 = vmatprep.subr.bf16.mxu0 0
      %876 = vmatpush1.bf16.msra.mxu0 0
      %877 = vmatprep.subr.bf16.mxu0 0
      %878 = vmatpush1.bf16.msra.mxu0 0
      %879 = vmatprep.subr.bf16.mxu0 0
      %880 = vmatpush1.bf16.msra.mxu0 0
      %881 = vmatprep.subr.bf16.mxu0 0
      %882 = vmatpush1.bf16.msra.mxu0 0
      %883 = vmatprep.subr.bf16.mxu0 0
      %884 = vmatpush1.bf16.msra.mxu0 0
      %885 = vmatprep.subr.bf16.mxu0 0
      %886 = vmatpush1.bf16.msra.mxu0 0
      %887 = vmatprep.subr.bf16.mxu0 0
      %888 = vmatpush1.bf16.msra.mxu0 0
      %889 = vmatprep.subr.bf16.mxu0 0
      %890 = vmatpush1.bf16.msra.mxu0 0
      %891 = vmatprep.subr.bf16.mxu0 0
      %892 = vmatpush1.bf16.msra.mxu0 0
      %893 = vmatprep.subr.bf16.mxu0 0
      %894 = vmatpush1.bf16.msra.mxu0 0
      %895 = vmatprep.subr.bf16.mxu0 0
      %896 = vmatpush1.bf16.msra.mxu0 0
      %897 = vmatprep.mubr.bf16.mxu0 0
      %898 = vmatmul.mubr.bf16.gmra.mrb[0].mxu0 %v734
      %v899 = vpop.f32.mrb[0].mxu0
      %v900 = vadd.f32 0.0, %v899
      %v901 = vpop.f32.mrb[0].mxu0
      %v902 = vadd.f32 0.0, %v901
      %v903 = vpop.f32.mrb[0].mxu0
      %v904 = vadd.f32 0.0, %v903
      %v905 = vpop.f32.mrb[0].mxu0
      %v906 = vadd.f32 0.0, %v905
      %907 = vdwg.mxu0
      %908 = vmatprep.subr.bf16.mxu0 %v645
      %909 = vmatpush1.bf16.msra.mxu0 %v644
      %910 = vmatprep.subr.bf16.mxu0 %v657
      %911 = vmatpush1.bf16.msra.mxu0 %v656
      %912 = vmatprep.subr.bf16.mxu0 %v669
      %913 = vmatpush1.bf16.msra.mxu0 %v668
      %914 = vmatprep.subr.bf16.mxu0 %v681
      %915 = vmatpush1.bf16.msra.mxu0 %v680
      %916 = vmatprep.subr.bf16.mxu0 0
      %917 = vmatpush1.bf16.msra.mxu0 0
      %918 = vmatprep.subr.bf16.mxu0 0
      %919 = vmatpush1.bf16.msra.mxu0 0
      %920 = vmatprep.subr.bf16.mxu0 0
      %921 = vmatpush1.bf16.msra.mxu0 0
      %922 = vmatprep.subr.bf16.mxu0 0
      %923 = vmatpush1.bf16.msra.mxu0 0
      %924 = vmatprep.subr.bf16.mxu0 0
      %925 = vmatpush1.bf16.msra.mxu0 0
      %926 = vmatprep.subr.bf16.mxu0 0
      %927 = vmatpush1.bf16.msra.mxu0 0
      %928 = vmatprep.subr.bf16.mxu0 0
      %929 = vmatpush1.bf16.msra.mxu0 0
      %930 = vmatprep.subr.bf16.mxu0 0
      %931 = vmatpush1.bf16.msra.mxu0 0
      %932 = vmatprep.subr.bf16.mxu0 0
      %933 = vmatpush1.bf16.msra.mxu0 0
      %934 = vmatprep.subr.bf16.mxu0 0
      %935 = vmatpush1.bf16.msra.mxu0 0
      %936 = vmatprep.subr.bf16.mxu0 0
      %937 = vmatpush1.bf16.msra.mxu0 0
      %938 = vmatprep.subr.bf16.mxu0 0
      %939 = vmatpush1.bf16.msra.mxu0 0
      %940 = vmatprep.mubr.bf16.mxu0 0
      %941 = vmatmul.mubr.bf16.gmra.mrb[0].mxu0 %v734
      %v942 = vpop.f32.mrb[0].mxu0
      %v943 = vadd.f32 0.0, %v942
      %v944 = vpop.f32.mrb[0].mxu0
      %v945 = vadd.f32 0.0, %v944
      %v946 = vpop.f32.mrb[0].mxu0
      %v947 = vadd.f32 0.0, %v946
      %v948 = vpop.f32.mrb[0].mxu0
      %v949 = vadd.f32 0.0, %v948
      %950 = vdwg.mxu0
      %951 = vmatprep.subr.bf16.mxu0 %v647
      %952 = vmatpush1.bf16.msra.mxu0 %v646
      %953 = vmatprep.subr.bf16.mxu0 %v659
      %954 = vmatpush1.bf16.msra.mxu0 %v658
      %955 = vmatprep.subr.bf16.mxu0 %v671
      %956 = vmatpush1.bf16.msra.mxu0 %v670
      %957 = vmatprep.subr.bf16.mxu0 %v683
      %958 = vmatpush1.bf16.msra.mxu0 %v682
      %959 = vmatprep.subr.bf16.mxu0 0
      %960 = vmatpush1.bf16.msra.mxu0 0
      %961 = vmatprep.subr.bf16.mxu0 0
      %962 = vmatpush1.bf16.msra.mxu0 0
      %963 = vmatprep.subr.bf16.mxu0 0
      %964 = vmatpush1.bf16.msra.mxu0 0
      %965 = vmatprep.subr.bf16.mxu0 0
      %966 = vmatpush1.bf16.msra.mxu0 0
      %967 = vmatprep.subr.bf16.mxu0 0
      %968 = vmatpush1.bf16.msra.mxu0 0
      %969 = vmatprep.subr.bf16.mxu0 0
      %970 = vmatpush1.bf16.msra.mxu0 0
      %971 = vmatprep.subr.bf16.mxu0 0
      %972 = vmatpush1.bf16.msra.mxu0 0
      %973 = vmatprep.subr.bf16.mxu0 0
      %974 = vmatpush1.bf16.msra.mxu0 0
      %975 = vmatprep.subr.bf16.mxu0 0
      %976 = vmatpush1.bf16.msra.mxu0 0
      %977 = vmatprep.subr.bf16.mxu0 0
      %978 = vmatpush1.bf16.msra.mxu0 0
      %979 = vmatprep.subr.bf16.mxu0 0
      %980 = vmatpush1.bf16.msra.mxu0 0
      %981 = vmatprep.subr.bf16.mxu0 0
      %982 = vmatpush1.bf16.msra.mxu0 0
      %983 = vmatprep.mubr.bf16.mxu0 0
      %984 = vmatmul.mubr.bf16.gmra.mrb[0].mxu0 %v734
      %v985 = vpop.f32.mrb[0].mxu0
      %v986 = vadd.f32 0.0, %v985
      %v987 = vpop.f32.mrb[0].mxu0
      %v988 = vadd.f32 0.0, %v987
      %v989 = vpop.f32.mrb[0].mxu0
      %v990 = vadd.f32 0.0, %v989
      %v991 = vpop.f32.mrb[0].mxu0
      %v992 = vadd.f32 0.0, %v991
      %993 = vdwg.mxu0
      %v994 = vld [vmem:[%s5] sm:$0xff]
      %v995 = vld [vmem:[%s5 + $0x8] sm:$0xf]
      %v998 = vlaneseq
      %v999 = vshrl.u32 %v998, 7
      %v1000 = vsub.s32 0, %v999
      %v1001 = vrot.slane %v994, %v1000
      %v1002 = vlaneseq
      %v1003 = vshrl.u32 %v1002, 7
      %v1004 = vsub.s32 1, %v1003
      %v1005 = vrot.slane %v994, %v1004
      %v1006 = vlaneseq
      %v1007 = vshrl.u32 %v1006, 7
      %v1008 = vsub.s32 2, %v1007
      %v1009 = vrot.slane %v994, %v1008
      %v1010 = vlaneseq
      %v1011 = vshrl.u32 %v1010, 7
      %v1012 = vsub.s32 3, %v1011
      %v1013 = vrot.slane %v994, %v1012
      %v1014 = vlaneseq
      %v1015 = vshrl.u32 %v1014, 7
      %v1016 = vsub.s32 4, %v1015
      %v1017 = vrot.slane %v994, %v1016
      %v1018 = vlaneseq
      %v1019 = vshrl.u32 %v1018, 7
      %v1020 = vsub.s32 5, %v1019
      %v1021 = vrot.slane %v994, %v1020
      %v1022 = vlaneseq
      %v1023 = vshrl.u32 %v1022, 7
      %v1024 = vsub.s32 6, %v1023
      %v1025 = vrot.slane %v994, %v1024
      %v1026 = vlaneseq
      %v1027 = vshrl.u32 %v1026, 7
      %v1028 = vsub.s32 7, %v1027
      %v1029 = vrot.slane %v994, %v1028
      %v1030 = vlaneseq
      %v1031 = vshrl.u32 %v1030, 7
      %v1032 = vsub.s32 0, %v1031
      %v1033 = vrot.slane %v995, %v1032
      %v1034 = vlaneseq
      %v1035 = vshrl.u32 %v1034, 7
      %v1036 = vsub.s32 1, %v1035
      %v1037 = vrot.slane %v995, %v1036
      %v1038 = vlaneseq
      %v1039 = vshrl.u32 %v1038, 7
      %v1040 = vsub.s32 2, %v1039
      %v1041 = vrot.slane %v995, %v1040
      %v1042 = vlaneseq
      %v1043 = vshrl.u32 %v1042, 7
      %v1044 = vsub.s32 3, %v1043
      %v1045 = vrot.slane %v995, %v1044
      %v1058 = vmul.f32 %v771, %v1001
      %v1059 = vmul.f32 %v773, %v1005
      %v1060 = vmul.f32 %v814, %v1009
      %v1061 = vmul.f32 %v816, %v1013
      %v1062 = vmul.f32 %v857, %v1017
      %v1063 = vmul.f32 %v859, %v1021
      %v1064 = vmul.f32 %v900, %v1025
      %v1065 = vmul.f32 %v902, %v1029
      %v1066 = vmul.f32 %v943, %v1033
      %v1067 = vmul.f32 %v945, %v1037
      %v1068 = vmul.f32 %v986, %v1041
      %v1069 = vmul.f32 %v988, %v1045
      %v1070 = vmul.f32 %v775, %v1001
      %v1071 = vmul.f32 %v777, %v1005
      %v1072 = vmul.f32 %v818, %v1009
      %v1073 = vmul.f32 %v820, %v1013
      %v1074 = vmul.f32 %v861, %v1017
      %v1075 = vmul.f32 %v863, %v1021
      %v1076 = vmul.f32 %v904, %v1025
      %v1077 = vmul.f32 %v906, %v1029
      %v1078 = vmul.f32 %v947, %v1033
      %v1079 = vmul.f32 %v949, %v1037
      %v1080 = vmul.f32 %v990, %v1041
      %v1081 = vmul.f32 %v992, %v1045
      %v1082 = vld [vmem:[%s6] sm:$0xff]
      %v1083 = vld [vmem:[%s6 + $0x8] sm:$0xf]
      %v1086 = vlaneseq
      %v1087 = vshrl.u32 %v1086, 7
      %v1088 = vsub.s32 0, %v1087
      %v1089 = vrot.slane %v1082, %v1088
      %v1090 = vlaneseq
      %v1091 = vshrl.u32 %v1090, 7
      %v1092 = vsub.s32 1, %v1091
      %v1093 = vrot.slane %v1082, %v1092
      %v1094 = vlaneseq
      %v1095 = vshrl.u32 %v1094, 7
      %v1096 = vsub.s32 2, %v1095
      %v1097 = vrot.slane %v1082, %v1096
      %v1098 = vlaneseq
      %v1099 = vshrl.u32 %v1098, 7
      %v1100 = vsub.s32 3, %v1099
      %v1101 = vrot.slane %v1082, %v1100
      %v1102 = vlaneseq
      %v1103 = vshrl.u32 %v1102, 7
      %v1104 = vsub.s32 4, %v1103
      %v1105 = vrot.slane %v1082, %v1104
      %v1106 = vlaneseq
      %v1107 = vshrl.u32 %v1106, 7
      %v1108 = vsub.s32 5, %v1107
      %v1109 = vrot.slane %v1082, %v1108
      %v1110 = vlaneseq
      %v1111 = vshrl.u32 %v1110, 7
      %v1112 = vsub.s32 6, %v1111
      %v1113 = vrot.slane %v1082, %v1112
      %v1114 = vlaneseq
      %v1115 = vshrl.u32 %v1114, 7
      %v1116 = vsub.s32 7, %v1115
      %v1117 = vrot.slane %v1082, %v1116
      %v1118 = vlaneseq
      %v1119 = vshrl.u32 %v1118, 7
      %v1120 = vsub.s32 0, %v1119
      %v1121 = vrot.slane %v1083, %v1120
      %v1122 = vlaneseq
      %v1123 = vshrl.u32 %v1122, 7
      %v1124 = vsub.s32 1, %v1123
      %v1125 = vrot.slane %v1083, %v1124
      %v1126 = vlaneseq
      %v1127 = vshrl.u32 %v1126, 7
      %v1128 = vsub.s32 2, %v1127
      %v1129 = vrot.slane %v1083, %v1128
      %v1130 = vlaneseq
      %v1131 = vshrl.u32 %v1130, 7
      %v1132 = vsub.s32 3, %v1131
      %v1133 = vrot.slane %v1083, %v1132
      %v1146 = vadd.f32 %v1058, %v1089
      %v1147 = vadd.f32 %v1059, %v1093
      %v1148 = vadd.f32 %v1060, %v1097
      %v1149 = vadd.f32 %v1061, %v1101
      %v1150 = vadd.f32 %v1062, %v1105
      %v1151 = vadd.f32 %v1063, %v1109
      %v1152 = vadd.f32 %v1064, %v1113
      %v1153 = vadd.f32 %v1065, %v1117
      %v1154 = vadd.f32 %v1066, %v1121
      %v1155 = vadd.f32 %v1067, %v1125
      %v1156 = vadd.f32 %v1068, %v1129
      %v1157 = vadd.f32 %v1069, %v1133
      %v1158 = vadd.f32 %v1070, %v1089
      %v1159 = vadd.f32 %v1071, %v1093
      %v1160 = vadd.f32 %v1072, %v1097
      %v1161 = vadd.f32 %v1073, %v1101
      %v1162 = vadd.f32 %v1074, %v1105
      %v1163 = vadd.f32 %v1075, %v1109
      %v1164 = vadd.f32 %v1076, %v1113
      %v1165 = vadd.f32 %v1077, %v1117
      %v1166 = vadd.f32 %v1078, %v1121
      %v1167 = vadd.f32 %v1079, %v1125
      %v1168 = vadd.f32 %v1080, %v1129
      %v1169 = vadd.f32 %v1081, %v1133
      %v1170 = vmul.f32 %v1146, 0.5
      %v1171 = vmul.f32 %v1147, 0.5
      %v1172 = vmul.f32 %v1148, 0.5
      %v1173 = vmul.f32 %v1149, 0.5
      %v1174 = vmul.f32 %v1150, 0.5
      %v1175 = vmul.f32 %v1151, 0.5
      %v1176 = vmul.f32 %v1152, 0.5
      %v1177 = vmul.f32 %v1153, 0.5
      %v1178 = vmul.f32 %v1154, 0.5
      %v1179 = vmul.f32 %v1155, 0.5
      %v1180 = vmul.f32 %v1156, 0.5
      %v1181 = vmul.f32 %v1157, 0.5
      %v1182 = vmul.f32 %v1158, 0.5
      %v1183 = vmul.f32 %v1159, 0.5
      %v1184 = vmul.f32 %v1160, 0.5
      %v1185 = vmul.f32 %v1161, 0.5
      %v1186 = vmul.f32 %v1162, 0.5
      %v1187 = vmul.f32 %v1163, 0.5
      %v1188 = vmul.f32 %v1164, 0.5
      %v1189 = vmul.f32 %v1165, 0.5
      %v1190 = vmul.f32 %v1166, 0.5
      %v1191 = vmul.f32 %v1167, 0.5
      %v1192 = vmul.f32 %v1168, 0.5
      %v1193 = vmul.f32 %v1169, 0.5
      %v1194 = vtanh.pop %v1170
      %v1195 = vtanh.pop %v1171
      %v1196 = vtanh.pop %v1172
      %v1197 = vtanh.pop %v1173
      %v1198 = vtanh.pop %v1174
      %v1199 = vtanh.pop %v1175
      %v1200 = vtanh.pop %v1176
      %v1201 = vtanh.pop %v1177
      %v1202 = vtanh.pop %v1178
      %v1203 = vtanh.pop %v1179
      %v1204 = vtanh.pop %v1180
      %v1205 = vtanh.pop %v1181
      %v1206 = vtanh.pop %v1182
      %v1207 = vtanh.pop %v1183
      %v1208 = vtanh.pop %v1184
      %v1209 = vtanh.pop %v1185
      %v1210 = vtanh.pop %v1186
      %v1211 = vtanh.pop %v1187
      %v1212 = vtanh.pop %v1188
      %v1213 = vtanh.pop %v1189
      %v1214 = vtanh.pop %v1190
      %v1215 = vtanh.pop %v1191
      %v1216 = vtanh.pop %v1192
      %v1217 = vtanh.pop %v1193
      %v1218 = vadd.f32 %v1194, 1.0
      %v1219 = vadd.f32 %v1195, 1.0
      %v1220 = vadd.f32 %v1196, 1.0
      %v1221 = vadd.f32 %v1197, 1.0
      %v1222 = vadd.f32 %v1198, 1.0
      %v1223 = vadd.f32 %v1199, 1.0
      %v1224 = vadd.f32 %v1200, 1.0
      %v1225 = vadd.f32 %v1201, 1.0
      %v1226 = vadd.f32 %v1202, 1.0
      %v1227 = vadd.f32 %v1203, 1.0
      %v1228 = vadd.f32 %v1204, 1.0
      %v1229 = vadd.f32 %v1205, 1.0
      %v1230 = vadd.f32 %v1206, 1.0
      %v1231 = vadd.f32 %v1207, 1.0
      %v1232 = vadd.f32 %v1208, 1.0
      %v1233 = vadd.f32 %v1209, 1.0
      %v1234 = vadd.f32 %v1210, 1.0
      %v1235 = vadd.f32 %v1211, 1.0
      %v1236 = vadd.f32 %v1212, 1.0
      %v1237 = vadd.f32 %v1213, 1.0
      %v1238 = vadd.f32 %v1214, 1.0
      %v1239 = vadd.f32 %v1215, 1.0
      %v1240 = vadd.f32 %v1216, 1.0
      %v1241 = vadd.f32 %v1217, 1.0
      %v1242 = vmul.f32 %v1218, 0.5
      %v1243 = vmul.f32 %v1219, 0.5
      %v1244 = vmul.f32 %v1220, 0.5
      %v1245 = vmul.f32 %v1221, 0.5
      %v1246 = vmul.f32 %v1222, 0.5
      %v1247 = vmul.f32 %v1223, 0.5
      %v1248 = vmul.f32 %v1224, 0.5
      %v1249 = vmul.f32 %v1225, 0.5
      %v1250 = vmul.f32 %v1226, 0.5
      %v1251 = vmul.f32 %v1227, 0.5
      %v1252 = vmul.f32 %v1228, 0.5
      %v1253 = vmul.f32 %v1229, 0.5
      %v1254 = vmul.f32 %v1230, 0.5
      %v1255 = vmul.f32 %v1231, 0.5
      %v1256 = vmul.f32 %v1232, 0.5
      %v1257 = vmul.f32 %v1233, 0.5
      %v1258 = vmul.f32 %v1234, 0.5
      %v1259 = vmul.f32 %v1235, 0.5
      %v1260 = vmul.f32 %v1236, 0.5
      %v1261 = vmul.f32 %v1237, 0.5
      %v1262 = vmul.f32 %v1238, 0.5
      %v1263 = vmul.f32 %v1239, 0.5
      %v1264 = vmul.f32 %v1240, 0.5
      %v1265 = vmul.f32 %v1241, 0.5
      %v1266 = vmul.f32 %v1146, %v1242
      %v1267 = vmul.f32 %v1147, %v1243
      %v1268 = vmul.f32 %v1148, %v1244
      %v1269 = vmul.f32 %v1149, %v1245
      %v1270 = vmul.f32 %v1150, %v1246
      %v1271 = vmul.f32 %v1151, %v1247
      %v1272 = vmul.f32 %v1152, %v1248
      %v1273 = vmul.f32 %v1153, %v1249
      %v1274 = vmul.f32 %v1154, %v1250
      %v1275 = vmul.f32 %v1155, %v1251
      %v1276 = vmul.f32 %v1156, %v1252
      %v1277 = vmul.f32 %v1157, %v1253
      %v1278 = vmul.f32 %v1158, %v1254
      %v1279 = vmul.f32 %v1159, %v1255
      %v1280 = vmul.f32 %v1160, %v1256
      %v1281 = vmul.f32 %v1161, %v1257
      %v1282 = vmul.f32 %v1162, %v1258
      %v1283 = vmul.f32 %v1163, %v1259
      %v1284 = vmul.f32 %v1164, %v1260
      %v1285 = vmul.f32 %v1165, %v1261
      %v1286 = vmul.f32 %v1166, %v1262
      %v1287 = vmul.f32 %v1167, %v1263
      %v1288 = vmul.f32 %v1168, %v1264
      %v1289 = vmul.f32 %v1169, %v1265
      %v1290 = vld [vmem:[%s335] sm:$0xff]
      %v1291 = vld [vmem:[%s335 + $0x8] sm:$0xf]
      %v1292 = vadd.f32 %v1266, %v1278
      %v1293 = vrot.slane %v1292, 4
      %v1294 = vadd.f32 %v1292, %v1293
      %v1295 = vrot.slane %v1294, 2
      %v1296 = vadd.f32 %v1294, %v1295
      %v1297 = vrot.slane %v1296, 1
      %v1298 = vadd.f32 %v1296, %v1297
      %v1299 = vadd.f32 %v1267, %v1279
      %v1300 = vrot.slane %v1299, 4
      %v1301 = vadd.f32 %v1299, %v1300
      %v1302 = vrot.slane %v1301, 2
      %v1303 = vadd.f32 %v1301, %v1302
      %v1304 = vrot.slane %v1303, 1
      %v1305 = vadd.f32 %v1303, %v1304
      %v1306 = vadd.f32 %v1268, %v1280
      %v1307 = vrot.slane %v1306, 4
      %v1308 = vadd.f32 %v1306, %v1307
      %v1309 = vrot.slane %v1308, 2
      %v1310 = vadd.f32 %v1308, %v1309
      %v1311 = vrot.slane %v1310, 1
      %v1312 = vadd.f32 %v1310, %v1311
      %v1313 = vadd.f32 %v1269, %v1281
      %v1314 = vrot.slane %v1313, 4
      %v1315 = vadd.f32 %v1313, %v1314
      %v1316 = vrot.slane %v1315, 2
      %v1317 = vadd.f32 %v1315, %v1316
      %v1318 = vrot.slane %v1317, 1
      %v1319 = vadd.f32 %v1317, %v1318
      %v1320 = vadd.f32 %v1270, %v1282
      %v1321 = vrot.slane %v1320, 4
      %v1322 = vadd.f32 %v1320, %v1321
      %v1323 = vrot.slane %v1322, 2
      %v1324 = vadd.f32 %v1322, %v1323
      %v1325 = vrot.slane %v1324, 1
      %v1326 = vadd.f32 %v1324, %v1325
      %v1327 = vadd.f32 %v1271, %v1283
      %v1328 = vrot.slane %v1327, 4
      %v1329 = vadd.f32 %v1327, %v1328
      %v1330 = vrot.slane %v1329, 2
      %v1331 = vadd.f32 %v1329, %v1330
      %v1332 = vrot.slane %v1331, 1
      %v1333 = vadd.f32 %v1331, %v1332
      %v1334 = vadd.f32 %v1272, %v1284
      %v1335 = vrot.slane %v1334, 4
      %v1336 = vadd.f32 %v1334, %v1335
      %v1337 = vrot.slane %v1336, 2
      %v1338 = vadd.f32 %v1336, %v1337
      %v1339 = vrot.slane %v1338, 1
      %v1340 = vadd.f32 %v1338, %v1339
      %v1341 = vadd.f32 %v1273, %v1285
      %v1342 = vrot.slane %v1341, 4
      %v1343 = vadd.f32 %v1341, %v1342
      %v1344 = vrot.slane %v1343, 2
      %v1345 = vadd.f32 %v1343, %v1344
      %v1346 = vrot.slane %v1345, 1
      %v1347 = vadd.f32 %v1345, %v1346
      %v1348 = vadd.f32 %v1274, %v1286
      %v1349 = vrot.slane %v1348, 4
      %v1350 = vadd.f32 %v1348, %v1349
      %v1351 = vrot.slane %v1350, 2
      %v1352 = vadd.f32 %v1350, %v1351
      %v1353 = vrot.slane %v1352, 1
      %v1354 = vadd.f32 %v1352, %v1353
      %v1355 = vadd.f32 %v1275, %v1287
      %v1356 = vrot.slane %v1355, 4
      %v1357 = vadd.f32 %v1355, %v1356
      %v1358 = vrot.slane %v1357, 2
      %v1359 = vadd.f32 %v1357, %v1358
      %v1360 = vrot.slane %v1359, 1
      %v1361 = vadd.f32 %v1359, %v1360
      %v1362 = vadd.f32 %v1276, %v1288
      %v1363 = vrot.slane %v1362, 4
      %v1364 = vadd.f32 %v1362, %v1363
      %v1365 = vrot.slane %v1364, 2
      %v1366 = vadd.f32 %v1364, %v1365
      %v1367 = vrot.slane %v1366, 1
      %v1368 = vadd.f32 %v1366, %v1367
      %v1369 = vadd.f32 %v1277, %v1289
      %v1370 = vrot.slane %v1369, 4
      %v1371 = vadd.f32 %v1369, %v1370
      %v1372 = vrot.slane %v1371, 2
      %v1373 = vadd.f32 %v1371, %v1372
      %v1374 = vrot.slane %v1373, 1
      %v1375 = vadd.f32 %v1373, %v1374
      %v1388 = vcombine.low %v1298, %v1305
      %v1389 = vcombine.low %v1312, %v1319
      %v1390 = vcombine.low %v1326, %v1333
      %v1391 = vcombine.low %v1340, %v1347
      %v1393 = vunpack.c.l.s4 1966171168
      %v1394 = vunpack.c.0.s8 %v1393
      %v1395 = vlaneseq
      %v1396 = vshrl.u32 %v1395, 7
      %v1397 = vsub.s32 %v1394, %v1396
      %v1398 = vrot.slane %v1388, %v1397
      %v1400 = vunpack.c.l.s4 1966171168
      %v1401 = vunpack.c.0.s8 %v1400
      %v1402 = vlaneseq
      %v1403 = vshrl.u32 %v1402, 7
      %v1404 = vsub.s32 %v1401, %v1403
      %v1405 = vrot.slane %v1389, %v1404
      %v1407 = vunpack.c.l.s4 1966171168
      %v1408 = vunpack.c.0.s8 %v1407
      %v1409 = vlaneseq
      %v1410 = vshrl.u32 %v1409, 7
      %v1411 = vsub.s32 %v1408, %v1410
      %v1412 = vrot.slane %v1390, %v1411
      %v1414 = vunpack.c.l.s4 1966171168
      %v1415 = vunpack.c.0.s8 %v1414
      %v1416 = vlaneseq
      %v1417 = vshrl.u32 %v1416, 7
      %v1418 = vsub.s32 %v1415, %v1417
      %v1419 = vrot.slane %v1391, %v1418
      %v1420 = vcombine.low %v1398, %v1405
      %v1421 = vcombine.low %v1412, %v1419
      %v1423 = vunpack.c.l.s4 1966171168
      %v1424 = vunpack.c.0.s8 %v1423
      %v1425 = vlaneseq
      %v1426 = vshrl.u32 %v1425, 7
      %v1427 = vsub.s32 %v1424, %v1426
      %v1428 = vrot.slane %v1420, %v1427
      %v1430 = vunpack.c.l.s4 1966171168
      %v1431 = vunpack.c.0.s8 %v1430
      %v1432 = vlaneseq
      %v1433 = vshrl.u32 %v1432, 7
      %v1434 = vsub.s32 %v1431, %v1433
      %v1435 = vrot.slane %v1421, %v1434
      %v1436 = vcombine.low %v1428, %v1435
      %v1437 = vcombine.low %v1354, %v1361
      %v1438 = vcombine.low %v1368, %v1375
      %v1440 = vunpack.c.l.s4 1966171168
      %v1441 = vunpack.c.0.s8 %v1440
      %v1442 = vlaneseq
      %v1443 = vshrl.u32 %v1442, 7
      %v1444 = vsub.s32 %v1441, %v1443
      %v1445 = vrot.slane %v1437, %v1444
      %v1447 = vunpack.c.l.s4 1966171168
      %v1448 = vunpack.c.0.s8 %v1447
      %v1449 = vlaneseq
      %v1450 = vshrl.u32 %v1449, 7
      %v1451 = vsub.s32 %v1448, %v1450
      %v1452 = vrot.slane %v1438, %v1451
      %v1453 = vcombine.low %v1445, %v1452
      %v1455 = vunpack.c.l.s4 1966171168
      %v1456 = vunpack.c.0.s8 %v1455
      %v1457 = vlaneseq
      %v1458 = vshrl.u32 %v1457, 7
      %v1459 = vsub.s32 %v1456, %v1458
      %v1460 = vrot.slane %v1453, %v1459
      %v1463 = vadd.f32 %v1290, %v1436
      %v1464 = vadd.f32 %v1291, %v1460
      %1465 = vst [vmem:[%s335] sm:$0xff] %v1463
      %v1466 = vlaneseq
      %vm1467 = vcmp.ge.s32.totalorder %v1466, 0
      %vm1468 = vcmp.lt.s32.totalorder %v1466, 512
      %vm1469 = vmand %vm1467, %vm1468
      %1470 = vst.msk [vmem:[%s335 + $0x8] sm:$0xf] %vm1469, %v1464
      %p1471 = scmp.lt.s32.totalorder %s23, 1
      %s1472 = scalar_select %p1471, %s23, 1
      %p1473 = scmp.lt.s32.totalorder %s24, 1
      %s1474 = scalar_select %p1473, %s24, 1
      %s1475 = smul.addr %s1474, 12
      %s1476 = smul.addr %s1472, 24
      %s1477 = sadd.s32 %s1475, %s1476
      %s1478 = scalar_lea.vmem %s7, %s1477
      // Predicated region
      $region53: #{cnn_model_forward.1} parent=47 // pred_check
        %p1479 = pneg %p215
      $region54: #{cnn_model_forward.1} parent=47 // pred_check_branch
        %1481 = sbr.rel (%p1479) target = $region56
      $region55: #{cnn_model_forward.1} parent=47 // pred_region
        _
      $region56: #{cnn_model_forward.1} parent=47 // pred_fallthru
        _
    $region48: #{cnn_model_forward.1} parent=5 // pred_fallthru
      _
    %p1482 = scmp.le.s32.totalorder 2, %s13
    // Predicated region
    $region57: #{cnn_model_forward.1} parent=5 // pred_check
      %p1483 = pneg %p1482
    $region58: #{cnn_model_forward.1} parent=5 // pred_check_branch
      %1485 = sbr.rel (%p1483) target = $region60
    $region59: #{cnn_model_forward.1} parent=5 // pred_region
      %s1486 = ssub.s32 %s13, 2
      // Predicated region
      $region61: #{cnn_model_forward.1} parent=59 // pred_check
        %p1487 = pneg %p221
      $region62: #{cnn_model_forward.1} parent=59 // pred_check_branch
        %1489 = sbr.rel (%p1487) target = $region64
      $region63: #{cnn_model_forward.1} parent=59 // pred_region
        %p1490 = scmp.lt.s32.totalorder %s26, 1
        %s1491 = scalar_select %p1490, %s26, 1
        %p1492 = scmp.lt.s32.totalorder %s27, 1
        %s1493 = scalar_select %p1492, %s27, 1
        %s1494 = smul.addr %s1493, 12
        %s1495 = smul.addr %s1491, 24
        %s1496 = sadd.s32 %s1494, %s1495
        %s1497 = scalar_lea.vmem %s7, %s1496
      $region64: #{cnn_model_forward.1} parent=59 // pred_fallthru
        _
    $region60: #{cnn_model_forward.1} parent=5 // pred_fallthru
      _
  $region6: #{cnn_model_forward.1} parent=0 // loop_footer
    %s17 = sadd.s32 1, %s13
  $region7: #{cnn_model_forward.1} parent=0 // loop_footer_branch
    %12 = sbr.rel target = $region3
  $region8: #{cnn_model_forward.1} parent=0 // loop_exit
    _

</llo_original>
